<compile_context>
chip_gen: v5e
topology: v5e:2x2
jax: 0.10.0
libtpu: 0.0.40
codegen_flags: <defaults>
</compile_context>

<pallas_src>
import functools
import math

import jax
import jax.numpy as jnp
from jax.experimental import pallas as pl
from jax.experimental.pallas import tpu as pltpu


def _layernorm(v, w, b, eps=1e-5):
    # v: (M, E) f32; w/b: (1, E) f32 rows.  Single-pass mean / mean-of-squares.
    mu = jnp.mean(v, axis=-1, keepdims=True)
    ms = jnp.mean(v * v, axis=-1, keepdims=True)
    var = jnp.maximum(ms - mu * mu, 0.0)
    return (v - mu) * jax.lax.rsqrt(var + eps) * w + b


def transformer_block_kernel(
    x_ref,        # (Bb, S, E)  input block                         (x dtype)
    w_qkv_ref,    # (E, 3E)     pre-transposed in_proj weight       (matmul dtype)
    b_qkv_ref,    # (1, 3E)     in_proj bias                        (f32)
    w_out_ref,    # (E, E)      pre-transposed out_proj weight      (matmul dtype)
    b_out_ref,    # (1, E)      out_proj bias                       (f32)
    ln1_w_ref,    # (1, E)
    ln1_b_ref,    # (1, E)
    w_ff1_ref,    # (E, F)      pre-transposed ff Linear 1 weight   (matmul dtype)
    b_ff1_ref,    # (1, F)
    w_ff2_ref,    # (F, E)      pre-transposed ff Linear 2 weight   (matmul dtype)
    b_ff2_ref,    # (1, E)
    ln2_w_ref,    # (1, E)
    ln2_b_ref,    # (1, E)
    o_ref,        # (Bb, S, E)
    o_scr,        # (Bb*S, E)   VMEM scratch for concatenated head outputs (matmul dtype)
    *,
    num_heads,
    matmul_dtype,
):
    f32 = jnp.float32
    mm = matmul_dtype

    Bb, S, E = x_ref.shape
    M = Bb * S
    H = num_heads
    hd = E // H
    scale = 1.0 / math.sqrt(hd)

    x = x_ref[...].reshape(M, E).astype(f32)       # residual path stays f32

    # ---- Fused QKV projection: one wide (M,E) @ (E,3E) MXU matmul -----------------
    qkv = jnp.dot(x.astype(mm), w_qkv_ref[...],
                  preferred_element_type=f32) + b_qkv_ref[...]          # (M, 3E) f32

    # fold 1/sqrt(hd) into q once; cast operands for the attention matmuls
    q = (qkv[:, 0 * E:1 * E] * scale).astype(mm).reshape(Bb, S, E)
    k = qkv[:, 1 * E:2 * E].astype(mm).reshape(Bb, S, E)
    v = qkv[:, 2 * E:3 * E].astype(mm).reshape(Bb, S, E)

    # ---- Multi-head attention (batched over Bb, looped over heads) ----------------
    for h in range(H):                              # static unroll, H is small
        sl = slice(h * hd, (h + 1) * hd)
        qh, kh, vh = q[:, :, sl], k[:, :, sl], v[:, :, sl]       # (Bb, S, hd)
        s = jnp.einsum("bqd,bkd->bqk", qh, kh,
                       preferred_element_type=f32)               # (Bb, S, S) f32
        s = s - jnp.max(s, axis=-1, keepdims=True)
        p = jnp.exp(s)
        denom = jnp.sum(p, axis=-1, keepdims=True)
        if matmul_dtype == jnp.float32:
            p = p / denom                            # exact divide on the parity path
        else:
            p = p * pl.reciprocal(denom, approx=True)  # divide on the EUP, not the VPU
        o_h = jnp.einsum("bqk,bkd->bqd", p.astype(mm), vh,
                         preferred_element_type=f32)             # (Bb, S, hd)
        # Stash head output at its lane offset; out-proj happens once after the loop.
        o_scr[:, sl] = o_h.reshape(M, hd).astype(mm)

    # ---- Single full-depth output projection: (M,E) @ (E,E) -----------------------
    attn_out = jnp.dot(o_scr[...], w_out_ref[...],
                       preferred_element_type=f32) + b_out_ref[...]     # (M, E) f32

    # ---- Residual + LayerNorm 1 ----------------------------------------------------
    x1 = _layernorm(x + attn_out, ln1_w_ref[...], ln1_b_ref[...])

    # ---- Feed-forward: Linear -> ReLU -> (Dropout: identity) -> Linear -------------
    h1 = jnp.dot(x1.astype(mm), w_ff1_ref[...],
                 preferred_element_type=f32) + b_ff1_ref[...]            # (M, F)
    h1 = jnp.maximum(h1, 0.0)
    ff = jnp.dot(h1.astype(mm), w_ff2_ref[...],
                 preferred_element_type=f32) + b_ff2_ref[...]            # (M, E)

    # ---- Residual + LayerNorm 2 ----------------------------------------------------
    y = _layernorm(x1 + ff, ln2_w_ref[...], ln2_b_ref[...])
    o_ref[...] = y.reshape(Bb, S, E).astype(o_ref.dtype)


def _pick_batch_block(B, S, target_m=256, max_m=1024):
    """Largest feasible batch block: prefer the smallest divisor of B with Bb*S >= target_m
    (and <= max_m); otherwise the largest divisor keeping Bb*S <= max_m."""
    divs = [d for d in range(1, B + 1) if B % d == 0]
    ok = [d for d in divs if target_m <= d * S <= max_m]
    if ok:
        return min(ok)
    within = [d for d in divs if d * S <= max_m]
    return max(within) if within else 1


def transformer_block(x, params, num_heads, *, matmul_dtype=jnp.bfloat16):
    """Fused TransformerBlock forward.

    Weights (PyTorch Linear convention (out, in)) are pre-transposed to (in, out) and
    cast to `matmul_dtype` OUTSIDE the kernel; biases/LN params stay f32.  All MXU
    matmuls accumulate in f32; softmax/LayerNorm/ReLU run in f32 on the VPU/EUP.
    """
    B, S, E = x.shape
    F = params["ff1_w"].shape[0]
    assert E % num_heads == 0

    f32 = jnp.float32
    mm = matmul_dtype

    Bb = _pick_batch_block(B, S)
    M = Bb * S

    w_qkv = params["in_proj_w"].T.astype(mm)     # (E, 3E)
    w_out = params["out_proj_w"].T.astype(mm)    # (E, E)
    w_ff1 = params["ff1_w"].T.astype(mm)         # (E, F)
    w_ff2 = params["ff2_w"].T.astype(mm)         # (F, E)

    b_qkv = params["in_proj_b"].astype(f32)      # (1, 3E)
    b_out = params["out_proj_b"].astype(f32)     # (1, E)
    b_ff1 = params["ff1_b"].astype(f32)          # (1, F)
    b_ff2 = params["ff2_b"].astype(f32)          # (1, E)
    ln1_w = params["ln1_w"].astype(f32)
    ln1_b = params["ln1_b"].astype(f32)
    ln2_w = params["ln2_w"].astype(f32)
    ln2_b = params["ln2_b"].astype(f32)

    weights = (w_qkv, b_qkv, w_out, b_out, ln1_w, ln1_b,
               w_ff1, b_ff1, w_ff2, b_ff2, ln2_w, ln2_b)

    # ---- VMEM budget -----------------------------------------------------------------
    def _nbytes(a):
        return int(a.size) * jnp.dtype(a.dtype).itemsize

    weight_bytes = sum(_nbytes(a) for a in weights)                 # single-buffered
    io_bytes = 2 * 2 * M * E * jnp.dtype(x.dtype).itemsize          # x + out, 2 buffers each
    scratch_bytes = M * E * jnp.dtype(mm).itemsize
    inter_bytes = 4 * (3 * M * E + 8 * M * E + 4 * Bb * S * S + 2 * M * F)  # f32 temporaries
    need = weight_bytes + io_bytes + scratch_bytes + inter_bytes

    try:
        cap = int(getattr(pltpu.get_tpu_info(), "vmem_capacity_bytes", 64 << 20))
    except Exception:                                                # pragma: no cover
        cap = 64 << 20
    vmem_limit = int(min(need + (16 << 20), cap - (16 << 20)))       # leave Mosaic headroom
    vmem_limit = max(vmem_limit, 32 << 20)

    # ---- BlockSpecs --------------------------------------------------------------------
    def resident(shape):
        # Constant index map -> no re-DMA across grid steps; single-buffer to halve VMEM.
        imap = lambda g: (0,) * len(shape)
        try:
            return pl.BlockSpec(shape, imap, pipeline_mode=pl.Buffered(1))
        except TypeError:   # older jax without pipeline_mode on BlockSpec
            return pl.BlockSpec(shape, imap)

    kernel = functools.partial(transformer_block_kernel,
                               num_heads=num_heads, matmul_dtype=mm)

    return pl.pallas_call(
        kernel,
        out_shape=jax.ShapeDtypeStruct((B, S, E), x.dtype),
        grid_spec=pltpu.PrefetchScalarGridSpec(
            num_scalar_prefetch=0,
            grid=(B // Bb,),
            in_specs=[
                pl.BlockSpec((Bb, S, E), lambda g: (g, 0, 0)),   # x
                resident((E, 3 * E)),   # W_qkv^T
                resident((1, 3 * E)),   # b_qkv
                resident((E, E)),       # W_out^T
                resident((1, E)),       # b_out
                resident((1, E)),       # ln1 w
                resident((1, E)),       # ln1 b
                resident((E, F)),       # W_ff1^T
                resident((1, F)),       # b_ff1
                resident((F, E)),       # W_ff2^T
                resident((1, E)),       # b_ff2
                resident((1, E)),       # ln2 w
                resident((1, E)),       # ln2 b
            ],
            out_specs=pl.BlockSpec((Bb, S, E), lambda g: (g, 0, 0)),
            scratch_shapes=[pltpu.VMEM((M, E), mm)],
        ),
        compiler_params=pltpu.CompilerParams(
            dimension_semantics=("parallel",),   # batch-block axis feeds both TCs (megacore)
            vmem_limit_bytes=vmem_limit,
        ),
    )(x, *weights)


def init_params(key, embed_dim, num_heads, ff_hidden):
    E, F = embed_dim, ff_hidden
    ks = jax.random.split(key, 12)
    s_attn = 1.0 / math.sqrt(E)
    s_ff1 = 1.0 / math.sqrt(E)
    s_ff2 = 1.0 / math.sqrt(F)
    u = jax.random.uniform
    return {
        "in_proj_w": u(ks[0], (3 * E, E), jnp.float32, -s_attn, s_attn),
        "in_proj_b": u(ks[1], (1, 3 * E), jnp.float32, -s_attn, s_attn),
        "out_proj_w": u(ks[2], (E, E), jnp.float32, -s_attn, s_attn),
        "out_proj_b": u(ks[3], (1, E), jnp.float32, -s_attn, s_attn),
        "ln1_w": 1.0 + 0.1 * u(ks[4], (1, E), jnp.float32, -1.0, 1.0),
        "ln1_b": 0.1 * u(ks[5], (1, E), jnp.float32, -1.0, 1.0),
        "ff1_w": u(ks[6], (F, E), jnp.float32, -s_ff1, s_ff1),
        "ff1_b": u(ks[7], (1, F), jnp.float32, -s_ff1, s_ff1),
        "ff2_w": u(ks[8], (E, F), jnp.float32, -s_ff2, s_ff2),
        "ff2_b": u(ks[9], (1, E), jnp.float32, -s_ff2, s_ff2),
        "ln2_w": 1.0 + 0.1 * u(ks[10], (1, E), jnp.float32, -1.0, 1.0),
        "ln2_b": 0.1 * u(ks[11], (1, E), jnp.float32, -1.0, 1.0),
    }


def reference(x, p, num_heads):
    """Pure-JAX f32 reference of the PyTorch TransformerBlock forward (eval mode)."""
    B, S, E = x.shape
    hd = E // num_heads
    qkv = jnp.einsum("bse,fe->bsf", x, p["in_proj_w"]) + p["in_proj_b"][0]
    q, k, v = jnp.split(qkv, 3, axis=-1)

    def split_heads(t):
        return t.reshape(B, S, num_heads, hd).transpose(0, 2, 1, 3)

    qh, kh, vh = split_heads(q), split_heads(k), split_heads(v)
    s = jnp.einsum("bhqd,bhkd->bhqk", qh, kh) / math.sqrt(hd)
    a = jax.nn.softmax(s, axis=-1)
    o = jnp.einsum("bhqk,bhkd->bhqd", a, vh).transpose(0, 2, 1, 3).reshape(B, S, E)
    attn_out = jnp.einsum("bse,fe->bsf", o, p["out_proj_w"]) + p["out_proj_b"][0]

    def ln(v_, w, b, eps=1e-5):
        mu = jnp.mean(v_, axis=-1, keepdims=True)
        var = jnp.mean((v_ - mu) ** 2, axis=-1, keepdims=True)
        return (v_ - mu) * jax.lax.rsqrt(var + eps) * w[0] + b[0]

    x1 = ln(x + attn_out, p["ln1_w"], p["ln1_b"])
    h1 = jax.nn.relu(jnp.einsum("bse,fe->bsf", x1, p["ff1_w"]) + p["ff1_b"][0])
    ff_out = jnp.einsum("bsf,ef->bse", h1, p["ff2_w"]) + p["ff2_b"][0]
    return ln(x1 + ff_out, p["ln2_w"], p["ln2_b"])


if __name__ == "__main__":
    # Small but lane-aligned shapes (E multiple of 128 keeps stores lane-dense).
    B, S, E, H, FH = 2, 16, 128, 4, 256

    key = jax.random.PRNGKey(0)
    kx, kp = jax.random.split(key)
    x = jax.random.normal(kx, (B, S, E), jnp.float32)
    params = init_params(kp, E, H, FH)

    ref = reference(x, params, H)

    # Exact path (f32 MXU operands, exact softmax divide): must match the reference closely.
    out_f32 = jax.block_until_ready(
        transformer_block(x, params, H, matmul_dtype=jnp.float32))
    assert out_f32.shape == (B, S, E)
    err_f32 = float(jnp.max(jnp.abs(out_f32 - ref)))
    assert jnp.allclose(out_f32, ref, atol=5e-3, rtol=5e-3), f"f32 kernel mismatch: {err_f32}"

    # Fast path (default): bf16 MXU operands with f32 accumulation — looser tolerance.
    out_bf16 = jax.block_until_ready(transformer_block(x, params, H))
    err_bf16 = float(jnp.max(jnp.abs(out_bf16 - ref)))
    assert jnp.allclose(out_bf16, ref, atol=1.5e-1, rtol=1.5e-1), f"bf16 kernel mismatch: {err_bf16}"

    print("KERNEL_OK")
</pallas_src>

<mosaic_0001>
module attributes {stable_mosaic.version = 11 : i64} {
  func.func @transformer_block_kernel(%arg0: i32, %arg1: memref<2x16x128xf32, #tpu.memory_space<vmem>>, %arg2: memref<128x384xf32, #tpu.memory_space<vmem>>, %arg3: memref<1x384xf32, #tpu.memory_space<vmem>>, %arg4: memref<128x128xf32, #tpu.memory_space<vmem>>, %arg5: memref<1x128xf32, #tpu.memory_space<vmem>>, %arg6: memref<1x128xf32, #tpu.memory_space<vmem>>, %arg7: memref<1x128xf32, #tpu.memory_space<vmem>>, %arg8: memref<128x256xf32, #tpu.memory_space<vmem>>, %arg9: memref<1x256xf32, #tpu.memory_space<vmem>>, %arg10: memref<256x128xf32, #tpu.memory_space<vmem>>, %arg11: memref<1x128xf32, #tpu.memory_space<vmem>>, %arg12: memref<1x128xf32, #tpu.memory_space<vmem>>, %arg13: memref<1x128xf32, #tpu.memory_space<vmem>>, %arg14: memref<2x16x128xf32, #tpu.memory_space<vmem>>, %arg15: memref<32x128xf32, #tpu.memory_space<vmem>>) attributes {dimension_semantics = [#tpu.dimension_semantics<parallel>], iteration_bounds = array<i64: 1>, scalar_prefetch = 0 : i64, scratch_operands = 1 : i64, tpu.core_type = #tpu.core_type<tc>, window_params = [{transform_indices = @transform_0, window_bounds = array<i64: 2, 16, 128>}, {pipeline_mode = #tpu.pipeline_mode<synchronous>, transform_indices = @transform_1, window_bounds = array<i64: 128, 384>}, {pipeline_mode = #tpu.pipeline_mode<synchronous>, transform_indices = @transform_2, window_bounds = array<i64: 1, 384>}, {pipeline_mode = #tpu.pipeline_mode<synchronous>, transform_indices = @transform_3, window_bounds = array<i64: 128, 128>}, {pipeline_mode = #tpu.pipeline_mode<synchronous>, transform_indices = @transform_4, window_bounds = array<i64: 1, 128>}, {pipeline_mode = #tpu.pipeline_mode<synchronous>, transform_indices = @transform_5, window_bounds = array<i64: 1, 128>}, {pipeline_mode = #tpu.pipeline_mode<synchronous>, transform_indices = @transform_6, window_bounds = array<i64: 1, 128>}, {pipeline_mode = #tpu.pipeline_mode<synchronous>, transform_indices = @transform_7, window_bounds = array<i64: 128, 256>}, {pipeline_mode = #tpu.pipeline_mode<synchronous>, transform_indices = @transform_8, window_bounds = array<i64: 1, 256>}, {pipeline_mode = #tpu.pipeline_mode<synchronous>, transform_indices = @transform_9, window_bounds = array<i64: 256, 128>}, {pipeline_mode = #tpu.pipeline_mode<synchronous>, transform_indices = @transform_10, window_bounds = array<i64: 1, 128>}, {pipeline_mode = #tpu.pipeline_mode<synchronous>, transform_indices = @transform_11, window_bounds = array<i64: 1, 128>}, {pipeline_mode = #tpu.pipeline_mode<synchronous>, transform_indices = @transform_12, window_bounds = array<i64: 1, 128>}, {transform_indices = @transform_13, window_bounds = array<i64: 2, 16, 128>}]} {
    %c0 = arith.constant 0 : index
    %c0_0 = arith.constant 0 : index
    %c0_1 = arith.constant 0 : index
    %0 = vector.load %arg1[%c0, %c0_0, %c0_1] : memref<2x16x128xf32, #tpu.memory_space<vmem>>, vector<2x16x128xf32>
    %1 = vector.shape_cast %0 : vector<2x16x128xf32> to vector<32x128xf32>
    %c0_2 = arith.constant 0 : index
    %c0_3 = arith.constant 0 : index
    %2 = vector.load %arg2[%c0_2, %c0_3] : memref<128x384xf32, #tpu.memory_space<vmem>>, vector<128x384xf32>
    %cst = arith.constant dense<0.000000e+00> : vector<32x384xf32>
    %3 = tpu.matmul %1, %2, %cst {dimension_numbers = #tpu.dot_dimension_numbers<[1], [0], [0], [1], [0, 0, 1, 1], [], []>} : vector<32x128xf32>, vector<128x384xf32>, vector<32x384xf32> -> vector<32x384xf32>
    %c0_4 = arith.constant 0 : index
    %c0_5 = arith.constant 0 : index
    %4 = vector.load %arg3[%c0_4, %c0_5] : memref<1x384xf32, #tpu.memory_space<vmem>>, vector<1x384xf32>
    %5 = vector.broadcast %4 : vector<1x384xf32> to vector<32x384xf32>
    %6 = arith.addf %3, %5 : vector<32x384xf32>
    %7 = vector.extract_strided_slice %6 {offsets = [0, 0], sizes = [32, 128], strides = [1, 1]} : vector<32x384xf32> to vector<32x128xf32>
    %cst_6 = arith.constant 0.176776692 : f32
    %8 = vector.broadcast %cst_6 : f32 to vector<32x128xf32>
    %9 = arith.mulf %7, %8 : vector<32x128xf32>
    %10 = vector.shape_cast %9 : vector<32x128xf32> to vector<2x16x128xf32>
    %11 = vector.extract_strided_slice %6 {offsets = [0, 128], sizes = [32, 128], strides = [1, 1]} : vector<32x384xf32> to vector<32x128xf32>
    %12 = vector.shape_cast %11 : vector<32x128xf32> to vector<2x16x128xf32>
    %13 = vector.extract_strided_slice %6 {offsets = [0, 256], sizes = [32, 128], strides = [1, 1]} : vector<32x384xf32> to vector<32x128xf32>
    %14 = vector.shape_cast %13 : vector<32x128xf32> to vector<2x16x128xf32>
    %15 = vector.extract_strided_slice %10 {offsets = [0, 0, 0], sizes = [2, 16, 32], strides = [1, 1, 1]} : vector<2x16x128xf32> to vector<2x16x32xf32>
    %16 = vector.extract_strided_slice %12 {offsets = [0, 0, 0], sizes = [2, 16, 32], strides = [1, 1, 1]} : vector<2x16x128xf32> to vector<2x16x32xf32>
    %17 = vector.extract_strided_slice %14 {offsets = [0, 0, 0], sizes = [2, 16, 32], strides = [1, 1, 1]} : vector<2x16x128xf32> to vector<2x16x32xf32>
    "tpu.trace_start"() <{level = 10 : i32, message = "bqd,bkd->bqk"}> : () -> ()
    %cst_7 = arith.constant dense<0.000000e+00> : vector<2x16x16xf32>
    %18 = tpu.matmul %15, %16, %cst_7 {dimension_numbers = #tpu.dot_dimension_numbers<[2], [2], [1], [1], [0, 0, 0, 1, 1, 1], [0], [0]>} : vector<2x16x32xf32>, vector<2x16x32xf32>, vector<2x16x16xf32> -> vector<2x16x16xf32>
    "tpu.trace_stop"() : () -> ()
    %cst_8 = arith.constant dense<0xFF800000> : vector<2x16xf32>
    %19 = vector.multi_reduction <maximumf>, %18, %cst_8 [2] : vector<2x16x16xf32> to vector<2x16xf32>
    %20 = vector.shape_cast %19 : vector<2x16xf32> to vector<2x16x1xf32>
    %21 = vector.broadcast %20 : vector<2x16x1xf32> to vector<2x16x16xf32>
    %22 = arith.subf %18, %21 : vector<2x16x16xf32>
    %23 = math.exp %22 : vector<2x16x16xf32>
    %cst_9 = arith.constant dense<0.000000e+00> : vector<2x16xf32>
    %24 = vector.multi_reduction <add>, %23, %cst_9 [2] : vector<2x16x16xf32> to vector<2x16xf32>
    %25 = vector.shape_cast %24 : vector<2x16xf32> to vector<2x16x1xf32>
    %26 = vector.broadcast %25 : vector<2x16x1xf32> to vector<2x16x16xf32>
    %27 = arith.divf %23, %26 : vector<2x16x16xf32>
    "tpu.trace_start"() <{level = 10 : i32, message = "bqk,bkd->bqd"}> : () -> ()
    %cst_10 = arith.constant dense<0.000000e+00> : vector<2x16x32xf32>
    %28 = tpu.matmul %27, %17, %cst_10 {dimension_numbers = #tpu.dot_dimension_numbers<[2], [1], [1], [2], [0, 0, 0, 1, 1, 2], [0], [0]>} : vector<2x16x16xf32>, vector<2x16x32xf32>, vector<2x16x32xf32> -> vector<2x16x32xf32>
    "tpu.trace_stop"() : () -> ()
    %29 = vector.shape_cast %28 : vector<2x16x32xf32> to vector<32x32xf32>
    %c0_11 = arith.constant 0 : index
    %c0_12 = arith.constant 0 : index
    %30 = vector.load %arg15[%c0_11, %c0_12] : memref<32x128xf32, #tpu.memory_space<vmem>>, vector<32x32xf32>
    tpu.vector_store %arg15[%c0_11, %c0_12], %29 {strides = array<i32>} : memref<32x128xf32, #tpu.memory_space<vmem>>, vector<32x32xf32>,
    %31 = vector.extract_strided_slice %10 {offsets = [0, 0, 32], sizes = [2, 16, 32], strides = [1, 1, 1]} : vector<2x16x128xf32> to vector<2x16x32xf32>
    %32 = vector.extract_strided_slice %12 {offsets = [0, 0, 32], sizes = [2, 16, 32], strides = [1, 1, 1]} : vector<2x16x128xf32> to vector<2x16x32xf32>
    %33 = vector.extract_strided_slice %14 {offsets = [0, 0, 32], sizes = [2, 16, 32], strides = [1, 1, 1]} : vector<2x16x128xf32> to vector<2x16x32xf32>
    "tpu.trace_start"() <{level = 10 : i32, message = "bqd,bkd->bqk"}> : () -> ()
    %cst_13 = arith.constant dense<0.000000e+00> : vector<2x16x16xf32>
    %34 = tpu.matmul %31, %32, %cst_13 {dimension_numbers = #tpu.dot_dimension_numbers<[2], [2], [1], [1], [0, 0, 0, 1, 1, 1], [0], [0]>} : vector<2x16x32xf32>, vector<2x16x32xf32>, vector<2x16x16xf32> -> vector<2x16x16xf32>
    "tpu.trace_stop"() : () -> ()
    %cst_14 = arith.constant dense<0xFF800000> : vector<2x16xf32>
    %35 = vector.multi_reduction <maximumf>, %34, %cst_14 [2] : vector<2x16x16xf32> to vector<2x16xf32>
    %36 = vector.shape_cast %35 : vector<2x16xf32> to vector<2x16x1xf32>
    %37 = vector.broadcast %36 : vector<2x16x1xf32> to vector<2x16x16xf32>
    %38 = arith.subf %34, %37 : vector<2x16x16xf32>
    %39 = math.exp %38 : vector<2x16x16xf32>
    %cst_15 = arith.constant dense<0.000000e+00> : vector<2x16xf32>
    %40 = vector.multi_reduction <add>, %39, %cst_15 [2] : vector<2x16x16xf32> to vector<2x16xf32>
    %41 = vector.shape_cast %40 : vector<2x16xf32> to vector<2x16x1xf32>
    %42 = vector.broadcast %41 : vector<2x16x1xf32> to vector<2x16x16xf32>
    %43 = arith.divf %39, %42 : vector<2x16x16xf32>
    "tpu.trace_start"() <{level = 10 : i32, message = "bqk,bkd->bqd"}> : () -> ()
    %cst_16 = arith.constant dense<0.000000e+00> : vector<2x16x32xf32>
    %44 = tpu.matmul %43, %33, %cst_16 {dimension_numbers = #tpu.dot_dimension_numbers<[2], [1], [1], [2], [0, 0, 0, 1, 1, 2], [0], [0]>} : vector<2x16x16xf32>, vector<2x16x32xf32>, vector<2x16x32xf32> -> vector<2x16x32xf32>
    "tpu.trace_stop"() : () -> ()
    %45 = vector.shape_cast %44 : vector<2x16x32xf32> to vector<32x32xf32>
    %c0_17 = arith.constant 0 : index
    %c32 = arith.constant 32 : index
    %46 = vector.load %arg15[%c0_17, %c32] : memref<32x128xf32, #tpu.memory_space<vmem>>, vector<32x32xf32>
    tpu.vector_store %arg15[%c0_17, %c32], %45 {strides = array<i32>} : memref<32x128xf32, #tpu.memory_space<vmem>>, vector<32x32xf32>,
    %47 = vector.extract_strided_slice %10 {offsets = [0, 0, 64], sizes = [2, 16, 32], strides = [1, 1, 1]} : vector<2x16x128xf32> to vector<2x16x32xf32>
    %48 = vector.extract_strided_slice %12 {offsets = [0, 0, 64], sizes = [2, 16, 32], strides = [1, 1, 1]} : vector<2x16x128xf32> to vector<2x16x32xf32>
    %49 = vector.extract_strided_slice %14 {offsets = [0, 0, 64], sizes = [2, 16, 32], strides = [1, 1, 1]} : vector<2x16x128xf32> to vector<2x16x32xf32>
    "tpu.trace_start"() <{level = 10 : i32, message = "bqd,bkd->bqk"}> : () -> ()
    %cst_18 = arith.constant dense<0.000000e+00> : vector<2x16x16xf32>
    %50 = tpu.matmul %47, %48, %cst_18 {dimension_numbers = #tpu.dot_dimension_numbers<[2], [2], [1], [1], [0, 0, 0, 1, 1, 1], [0], [0]>} : vector<2x16x32xf32>, vector<2x16x32xf32>, vector<2x16x16xf32> -> vector<2x16x16xf32>
    "tpu.trace_stop"() : () -> ()
    %cst_19 = arith.constant dense<0xFF800000> : vector<2x16xf32>
    %51 = vector.multi_reduction <maximumf>, %50, %cst_19 [2] : vector<2x16x16xf32> to vector<2x16xf32>
    %52 = vector.shape_cast %51 : vector<2x16xf32> to vector<2x16x1xf32>
    %53 = vector.broadcast %52 : vector<2x16x1xf32> to vector<2x16x16xf32>
    %54 = arith.subf %50, %53 : vector<2x16x16xf32>
    %55 = math.exp %54 : vector<2x16x16xf32>
    %cst_20 = arith.constant dense<0.000000e+00> : vector<2x16xf32>
    %56 = vector.multi_reduction <add>, %55, %cst_20 [2] : vector<2x16x16xf32> to vector<2x16xf32>
    %57 = vector.shape_cast %56 : vector<2x16xf32> to vector<2x16x1xf32>
    %58 = vector.broadcast %57 : vector<2x16x1xf32> to vector<2x16x16xf32>
    %59 = arith.divf %55, %58 : vector<2x16x16xf32>
    "tpu.trace_start"() <{level = 10 : i32, message = "bqk,bkd->bqd"}> : () -> ()
    %cst_21 = arith.constant dense<0.000000e+00> : vector<2x16x32xf32>
    %60 = tpu.matmul %59, %49, %cst_21 {dimension_numbers = #tpu.dot_dimension_numbers<[2], [1], [1], [2], [0, 0, 0, 1, 1, 2], [0], [0]>} : vector<2x16x16xf32>, vector<2x16x32xf32>, vector<2x16x32xf32> -> vector<2x16x32xf32>
    "tpu.trace_stop"() : () -> ()
    %61 = vector.shape_cast %60 : vector<2x16x32xf32> to vector<32x32xf32>
    %c0_22 = arith.constant 0 : index
    %c64 = arith.constant 64 : index
    %62 = vector.load %arg15[%c0_22, %c64] : memref<32x128xf32, #tpu.memory_space<vmem>>, vector<32x32xf32>
    tpu.vector_store %arg15[%c0_22, %c64], %61 {strides = array<i32>} : memref<32x128xf32, #tpu.memory_space<vmem>>, vector<32x32xf32>,
    %63 = vector.extract_strided_slice %10 {offsets = [0, 0, 96], sizes = [2, 16, 32], strides = [1, 1, 1]} : vector<2x16x128xf32> to vector<2x16x32xf32>
    %64 = vector.extract_strided_slice %12 {offsets = [0, 0, 96], sizes = [2, 16, 32], strides = [1, 1, 1]} : vector<2x16x128xf32> to vector<2x16x32xf32>
    %65 = vector.extract_strided_slice %14 {offsets = [0, 0, 96], sizes = [2, 16, 32], strides = [1, 1, 1]} : vector<2x16x128xf32> to vector<2x16x32xf32>
    "tpu.trace_start"() <{level = 10 : i32, message = "bqd,bkd->bqk"}> : () -> ()
    %cst_23 = arith.constant dense<0.000000e+00> : vector<2x16x16xf32>
    %66 = tpu.matmul %63, %64, %cst_23 {dimension_numbers = #tpu.dot_dimension_numbers<[2], [2], [1], [1], [0, 0, 0, 1, 1, 1], [0], [0]>} : vector<2x16x32xf32>, vector<2x16x32xf32>, vector<2x16x16xf32> -> vector<2x16x16xf32>
    "tpu.trace_stop"() : () -> ()
    %cst_24 = arith.constant dense<0xFF800000> : vector<2x16xf32>
    %67 = vector.multi_reduction <maximumf>, %66, %cst_24 [2] : vector<2x16x16xf32> to vector<2x16xf32>
    %68 = vector.shape_cast %67 : vector<2x16xf32> to vector<2x16x1xf32>
    %69 = vector.broadcast %68 : vector<2x16x1xf32> to vector<2x16x16xf32>
    %70 = arith.subf %66, %69 : vector<2x16x16xf32>
    %71 = math.exp %70 : vector<2x16x16xf32>
    %cst_25 = arith.constant dense<0.000000e+00> : vector<2x16xf32>
    %72 = vector.multi_reduction <add>, %71, %cst_25 [2] : vector<2x16x16xf32> to vector<2x16xf32>
    %73 = vector.shape_cast %72 : vector<2x16xf32> to vector<2x16x1xf32>
    %74 = vector.broadcast %73 : vector<2x16x1xf32> to vector<2x16x16xf32>
    %75 = arith.divf %71, %74 : vector<2x16x16xf32>
    "tpu.trace_start"() <{level = 10 : i32, message = "bqk,bkd->bqd"}> : () -> ()
    %cst_26 = arith.constant dense<0.000000e+00> : vector<2x16x32xf32>
    %76 = tpu.matmul %75, %65, %cst_26 {dimension_numbers = #tpu.dot_dimension_numbers<[2], [1], [1], [2], [0, 0, 0, 1, 1, 2], [0], [0]>} : vector<2x16x16xf32>, vector<2x16x32xf32>, vector<2x16x32xf32> -> vector<2x16x32xf32>
    "tpu.trace_stop"() : () -> ()
    %77 = vector.shape_cast %76 : vector<2x16x32xf32> to vector<32x32xf32>
    %c0_27 = arith.constant 0 : index
    %c96 = arith.constant 96 : index
    %78 = vector.load %arg15[%c0_27, %c96] : memref<32x128xf32, #tpu.memory_space<vmem>>, vector<32x32xf32>
    tpu.vector_store %arg15[%c0_27, %c96], %77 {strides = array<i32>} : memref<32x128xf32, #tpu.memory_space<vmem>>, vector<32x32xf32>,
    %c0_28 = arith.constant 0 : index
    %c0_29 = arith.constant 0 : index
    %79 = vector.load %arg15[%c0_28, %c0_29] : memref<32x128xf32, #tpu.memory_space<vmem>>, vector<32x128xf32>
    %c0_30 = arith.constant 0 : index
    %c0_31 = arith.constant 0 : index
    %80 = vector.load %arg4[%c0_30, %c0_31] : memref<128x128xf32, #tpu.memory_space<vmem>>, vector<128x128xf32>
    %cst_32 = arith.constant dense<0.000000e+00> : vector<32x128xf32>
    %81 = tpu.matmul %79, %80, %cst_32 {dimension_numbers = #tpu.dot_dimension_numbers<[1], [0], [0], [1], [0, 0, 1, 1], [], []>} : vector<32x128xf32>, vector<128x128xf32>, vector<32x128xf32> -> vector<32x128xf32>
    %c0_33 = arith.constant 0 : index
    %c0_34 = arith.constant 0 : index
    %82 = vector.load %arg5[%c0_33, %c0_34] : memref<1x128xf32, #tpu.memory_space<vmem>>, vector<1x128xf32>
    %83 = vector.broadcast %82 : vector<1x128xf32> to vector<32x128xf32>
    %84 = arith.addf %81, %83 : vector<32x128xf32>
    %85 = arith.addf %1, %84 : vector<32x128xf32>
    %c0_35 = arith.constant 0 : index
    %c0_36 = arith.constant 0 : index
    %86 = vector.load %arg6[%c0_35, %c0_36] : memref<1x128xf32, #tpu.memory_space<vmem>>, vector<1x128xf32>
    %c0_37 = arith.constant 0 : index
    %c0_38 = arith.constant 0 : index
    %87 = vector.load %arg7[%c0_37, %c0_38] : memref<1x128xf32, #tpu.memory_space<vmem>>, vector<1x128xf32>
    %cst_39 = arith.constant dense<0.000000e+00> : vector<32xf32>
    %88 = vector.multi_reduction <add>, %85, %cst_39 [1] : vector<32x128xf32> to vector<32xf32>
    %89 = vector.shape_cast %88 : vector<32xf32> to vector<32x1xf32>
    %cst_40 = arith.constant 1.280000e+02 : f32
    %90 = vector.broadcast %cst_40 : f32 to vector<32x1xf32>
    %91 = arith.divf %89, %90 : vector<32x1xf32>
    %92 = arith.mulf %85, %85 : vector<32x128xf32>
    %cst_41 = arith.constant dense<0.000000e+00> : vector<32xf32>
    %93 = vector.multi_reduction <add>, %92, %cst_41 [1] : vector<32x128xf32> to vector<32xf32>
    %94 = vector.shape_cast %93 : vector<32xf32> to vector<32x1xf32>
    %cst_42 = arith.constant 1.280000e+02 : f32
    %95 = vector.broadcast %cst_42 : f32 to vector<32x1xf32>
    %96 = arith.divf %94, %95 : vector<32x1xf32>
    %97 = arith.mulf %91, %91 : vector<32x1xf32>
    %98 = arith.subf %96, %97 : vector<32x1xf32>
    %cst_43 = arith.constant 0.000000e+00 : f32
    %99 = vector.broadcast %cst_43 : f32 to vector<32x1xf32>
    %100 = arith.maximumf %98, %99 : vector<32x1xf32>
    %101 = vector.broadcast %91 : vector<32x1xf32> to vector<32x128xf32>
    %102 = arith.subf %85, %101 : vector<32x128xf32>
    %cst_44 = arith.constant 9.99999974E-6 : f32
    %103 = vector.broadcast %cst_44 : f32 to vector<32x1xf32>
    %104 = arith.addf %100, %103 : vector<32x1xf32>
    %105 = math.rsqrt %104 : vector<32x1xf32>
    %106 = vector.broadcast %105 : vector<32x1xf32> to vector<32x128xf32>
    %107 = arith.mulf %102, %106 : vector<32x128xf32>
    %108 = vector.broadcast %86 : vector<1x128xf32> to vector<32x128xf32>
    %109 = arith.mulf %107, %108 : vector<32x128xf32>
    %110 = vector.broadcast %87 : vector<1x128xf32> to vector<32x128xf32>
    %111 = arith.addf %109, %110 : vector<32x128xf32>
    %c0_45 = arith.constant 0 : index
    %c0_46 = arith.constant 0 : index
    %112 = vector.load %arg8[%c0_45, %c0_46] : memref<128x256xf32, #tpu.memory_space<vmem>>, vector<128x256xf32>
    %cst_47 = arith.constant dense<0.000000e+00> : vector<32x256xf32>
    %113 = tpu.matmul %111, %112, %cst_47 {dimension_numbers = #tpu.dot_dimension_numbers<[1], [0], [0], [1], [0, 0, 1, 1], [], []>} : vector<32x128xf32>, vector<128x256xf32>, vector<32x256xf32> -> vector<32x256xf32>
    %c0_48 = arith.constant 0 : index
    %c0_49 = arith.constant 0 : index
    %114 = vector.load %arg9[%c0_48, %c0_49] : memref<1x256xf32, #tpu.memory_space<vmem>>, vector<1x256xf32>
    %115 = vector.broadcast %114 : vector<1x256xf32> to vector<32x256xf32>
    %116 = arith.addf %113, %115 : vector<32x256xf32>
    %cst_50 = arith.constant 0.000000e+00 : f32
    %117 = vector.broadcast %cst_50 : f32 to vector<32x256xf32>
    %118 = arith.maximumf %116, %117 : vector<32x256xf32>
    %c0_51 = arith.constant 0 : index
    %c0_52 = arith.constant 0 : index
    %119 = vector.load %arg10[%c0_51, %c0_52] : memref<256x128xf32, #tpu.memory_space<vmem>>, vector<256x128xf32>
    %cst_53 = arith.constant dense<0.000000e+00> : vector<32x128xf32>
    %120 = tpu.matmul %118, %119, %cst_53 {dimension_numbers = #tpu.dot_dimension_numbers<[1], [0], [0], [1], [0, 0, 1, 1], [], []>} : vector<32x256xf32>, vector<256x128xf32>, vector<32x128xf32> -> vector<32x128xf32>
    %c0_54 = arith.constant 0 : index
    %c0_55 = arith.constant 0 : index
    %121 = vector.load %arg11[%c0_54, %c0_55] : memref<1x128xf32, #tpu.memory_space<vmem>>, vector<1x128xf32>
    %122 = vector.broadcast %121 : vector<1x128xf32> to vector<32x128xf32>
    %123 = arith.addf %120, %122 : vector<32x128xf32>
    %124 = arith.addf %111, %123 : vector<32x128xf32>
    %c0_56 = arith.constant 0 : index
    %c0_57 = arith.constant 0 : index
    %125 = vector.load %arg12[%c0_56, %c0_57] : memref<1x128xf32, #tpu.memory_space<vmem>>, vector<1x128xf32>
    %c0_58 = arith.constant 0 : index
    %c0_59 = arith.constant 0 : index
    %126 = vector.load %arg13[%c0_58, %c0_59] : memref<1x128xf32, #tpu.memory_space<vmem>>, vector<1x128xf32>
    %cst_60 = arith.constant dense<0.000000e+00> : vector<32xf32>
    %127 = vector.multi_reduction <add>, %124, %cst_60 [1] : vector<32x128xf32> to vector<32xf32>
    %128 = vector.shape_cast %127 : vector<32xf32> to vector<32x1xf32>
    %cst_61 = arith.constant 1.280000e+02 : f32
    %129 = vector.broadcast %cst_61 : f32 to vector<32x1xf32>
    %130 = arith.divf %128, %129 : vector<32x1xf32>
    %131 = arith.mulf %124, %124 : vector<32x128xf32>
    %cst_62 = arith.constant dense<0.000000e+00> : vector<32xf32>
    %132 = vector.multi_reduction <add>, %131, %cst_62 [1] : vector<32x128xf32> to vector<32xf32>
    %133 = vector.shape_cast %132 : vector<32xf32> to vector<32x1xf32>
    %cst_63 = arith.constant 1.280000e+02 : f32
    %134 = vector.broadcast %cst_63 : f32 to vector<32x1xf32>
    %135 = arith.divf %133, %134 : vector<32x1xf32>
    %136 = arith.mulf %130, %130 : vector<32x1xf32>
    %137 = arith.subf %135, %136 : vector<32x1xf32>
    %cst_64 = arith.constant 0.000000e+00 : f32
    %138 = vector.broadcast %cst_64 : f32 to vector<32x1xf32>
    %139 = arith.maximumf %137, %138 : vector<32x1xf32>
    %140 = vector.broadcast %130 : vector<32x1xf32> to vector<32x128xf32>
    %141 = arith.subf %124, %140 : vector<32x128xf32>
    %cst_65 = arith.constant 9.99999974E-6 : f32
    %142 = vector.broadcast %cst_65 : f32 to vector<32x1xf32>
    %143 = arith.addf %139, %142 : vector<32x1xf32>
    %144 = math.rsqrt %143 : vector<32x1xf32>
    %145 = vector.broadcast %144 : vector<32x1xf32> to vector<32x128xf32>
    %146 = arith.mulf %141, %145 : vector<32x128xf32>
    %147 = vector.broadcast %125 : vector<1x128xf32> to vector<32x128xf32>
    %148 = arith.mulf %146, %147 : vector<32x128xf32>
    %149 = vector.broadcast %126 : vector<1x128xf32> to vector<32x128xf32>
    %150 = arith.addf %148, %149 : vector<32x128xf32>
    %151 = vector.shape_cast %150 : vector<32x128xf32> to vector<2x16x128xf32>
    %c0_66 = arith.constant 0 : index
    %c0_67 = arith.constant 0 : index
    %c0_68 = arith.constant 0 : index
    %152 = vector.load %arg14[%c0_66, %c0_67, %c0_68] : memref<2x16x128xf32, #tpu.memory_space<vmem>>, vector<2x16x128xf32>
    tpu.vector_store %arg14[%c0_66, %c0_67, %c0_68], %151 {strides = array<i32>} : memref<2x16x128xf32, #tpu.memory_space<vmem>>, vector<2x16x128xf32>,
    return
  }
  func.func @transform_0(%arg0: i32) -> (i32, i32, i32) {
    %c0_i32 = arith.constant 0 : i32
    %c0_i32_0 = arith.constant 0 : i32
    %c0_i32_1 = arith.constant 0 : i32
    return %arg0, %c0_i32, %c0_i32_0 : i32, i32, i32
  }
  func.func @transform_1(%arg0: i32) -> (i32, i32) {
    %c0_i32 = arith.constant 0 : i32
    %c0_i32_0 = arith.constant 0 : i32
    %c0_i32_1 = arith.constant 0 : i32
    return %c0_i32, %c0_i32_0 : i32, i32
  }
  func.func @transform_2(%arg0: i32) -> (i32, i32) {
    %c0_i32 = arith.constant 0 : i32
    %c0_i32_0 = arith.constant 0 : i32
    %c0_i32_1 = arith.constant 0 : i32
    return %c0_i32, %c0_i32_0 : i32, i32
  }
  func.func @transform_3(%arg0: i32) -> (i32, i32) {
    %c0_i32 = arith.constant 0 : i32
    %c0_i32_0 = arith.constant 0 : i32
    %c0_i32_1 = arith.constant 0 : i32
    return %c0_i32, %c0_i32_0 : i32, i32
  }
  func.func @transform_4(%arg0: i32) -> (i32, i32) {
    %c0_i32 = arith.constant 0 : i32
    %c0_i32_0 = arith.constant 0 : i32
    %c0_i32_1 = arith.constant 0 : i32
    return %c0_i32, %c0_i32_0 : i32, i32
  }
  func.func @transform_5(%arg0: i32) -> (i32, i32) {
    %c0_i32 = arith.constant 0 : i32
    %c0_i32_0 = arith.constant 0 : i32
    %c0_i32_1 = arith.constant 0 : i32
    return %c0_i32, %c0_i32_0 : i32, i32
  }
  func.func @transform_6(%arg0: i32) -> (i32, i32) {
    %c0_i32 = arith.constant 0 : i32
    %c0_i32_0 = arith.constant 0 : i32
    %c0_i32_1 = arith.constant 0 : i32
    return %c0_i32, %c0_i32_0 : i32, i32
  }
  func.func @transform_7(%arg0: i32) -> (i32, i32) {
    %c0_i32 = arith.constant 0 : i32
    %c0_i32_0 = arith.constant 0 : i32
    %c0_i32_1 = arith.constant 0 : i32
    return %c0_i32, %c0_i32_0 : i32, i32
  }
  func.func @transform_8(%arg0: i32) -> (i32, i32) {
    %c0_i32 = arith.constant 0 : i32
    %c0_i32_0 = arith.constant 0 : i32
    %c0_i32_1 = arith.constant 0 : i32
    return %c0_i32, %c0_i32_0 : i32, i32
  }
  func.func @transform_9(%arg0: i32) -> (i32, i32) {
    %c0_i32 = arith.constant 0 : i32
    %c0_i32_0 = arith.constant 0 : i32
    %c0_i32_1 = arith.constant 0 : i32
    return %c0_i32, %c0_i32_0 : i32, i32
  }
  func.func @transform_10(%arg0: i32) -> (i32, i32) {
    %c0_i32 = arith.constant 0 : i32
    %c0_i32_0 = arith.constant 0 : i32
    %c0_i32_1 = arith.constant 0 : i32
    return %c0_i32, %c0_i32_0 : i32, i32
  }
  func.func @transform_11(%arg0: i32) -> (i32, i32) {
    %c0_i32 = arith.constant 0 : i32
    %c0_i32_0 = arith.constant 0 : i32
    %c0_i32_1 = arith.constant 0 : i32
    return %c0_i32, %c0_i32_0 : i32, i32
  }
  func.func @transform_12(%arg0: i32) -> (i32, i32) {
    %c0_i32 = arith.constant 0 : i32
    %c0_i32_0 = arith.constant 0 : i32
    %c0_i32_1 = arith.constant 0 : i32
    return %c0_i32, %c0_i32_0 : i32, i32
  }
  func.func @transform_13(%arg0: i32) -> (i32, i32, i32) {
    %c0_i32 = arith.constant 0 : i32
    %c0_i32_0 = arith.constant 0 : i32
    %c0_i32_1 = arith.constant 0 : i32
    return %arg0, %c0_i32, %c0_i32_0 : i32, i32, i32
  }
}

</mosaic_0001>

<llo_original>
// kernel: tpu_custom_call.1
$region0: #{tpu_custom_call.1}
  #allocation0 [shape = 'u32[]', space=smem, size = 0x4, offset = 0x4, fixed_abs, tag = 'smem constant byte address 0x4 - core index']
  #allocation1 [shape = 'u32[72,128]{1,0:T(1,128)}', space=vmem, size = 0x9000, scoped, tag = 'internal scratch']
  #allocation2 [shape = 'f32[32,128]{1,0:T(8,128)}', space=vmem, size = 0x4000, scoped, tag = 'scratch operand']
  %s0 = inlined_call_operand.hbm [shape: f32[2,16,128], index: 0, kind: input, shape index: {}]
  %s1 = inlined_call_operand.hbm [shape: f32[128,384], index: 1, kind: input, shape index: {}]
  %s2 = inlined_call_operand.hbm [shape: f32[1,384], index: 2, kind: input, shape index: {}]
  %s3 = inlined_call_operand.hbm [shape: f32[128,128], index: 3, kind: input, shape index: {}]
  %s4 = inlined_call_operand.vmem [shape: f32[1,128], index: 4, kind: input, shape index: {}]
  %s5 = inlined_call_operand.vmem [shape: f32[1,128], index: 5, kind: input, shape index: {}]
  %s6 = inlined_call_operand.vmem [shape: f32[1,128], index: 6, kind: input, shape index: {}]
  %s7 = inlined_call_operand.hbm [shape: f32[128,256], index: 7, kind: input, shape index: {}]
  %s8 = inlined_call_operand.vmem [shape: f32[1,256], index: 8, kind: input, shape index: {}]
  %s9 = inlined_call_operand.hbm [shape: f32[256,128], index: 9, kind: input, shape index: {}]
  %s10 = inlined_call_operand.vmem [shape: f32[1,128], index: 10, kind: input, shape index: {}]
  %s11 = inlined_call_operand.vmem [shape: f32[1,128], index: 11, kind: input, shape index: {}]
  %s12 = inlined_call_operand.vmem [shape: f32[1,128], index: 12, kind: input, shape index: {}]
  %s13 = inlined_call_operand.hbm [shape: f32[2,16,128], index: 13, kind: output, shape index: {}]
  %s14 = sld [smem:[#allocation0]]
  $region86: #{tpu_custom_call.1} parent=0
    _
  %s16 = ssub.s32 1, %s14
  %s17 = scalar_select 0, %s16, %s14
  $region1: #{tpu_custom_call.1} parent=0
    #allocation3 [shape = 'u8[16384]{0}', space=vmem, size = 0x4000, scoped, tag = 'input window, operand 0, single buffered']
    #allocation4 [shape = 's32[1]{0}', space=sflag, size = 0x4, scoped, tag = 'scoped memory for tpu_custom_call.1']
    #allocation5 [shape = 's32[1]{0}', space=sflag, size = 0x4, scoped, tag = 'scoped memory for tpu_custom_call.1']
    #allocation6 [shape = 'u8[196608]{0}', space=vmem, size = 0x30000, scoped, tag = 'input window, operand 1, single buffered']
    #allocation7 [shape = 's32[1]{0}', space=sflag, size = 0x4, scoped, tag = 'scoped memory for tpu_custom_call.1']
    #allocation8 [shape = 'u8[1536]{0}', space=vmem, size = 0x800, scoped, tag = 'input window, operand 2, single buffered']
    #allocation9 [shape = 'u8[65536]{0}', space=vmem, size = 0x10000, scoped, tag = 'input window, operand 3, single buffered']
    #allocation10 [shape = 's32[1]{0}', space=sflag, size = 0x4, scoped, tag = 'scoped memory for tpu_custom_call.1']
    #allocation11 [shape = 'u8[131072]{0}', space=vmem, size = 0x20000, scoped, tag = 'input window, operand 7, single buffered']
    #allocation12 [shape = 'u8[131072]{0}', space=vmem, size = 0x20000, scoped, tag = 'input window, operand 9, single buffered']
    #allocation13 [shape = 's32[1]{0}', space=sflag, size = 0x4, scoped, tag = 'scoped memory for tpu_custom_call.1']
    #allocation14 [shape = 'u8[16384]{0}', space=vmem, size = 0x4000, scoped, tag = 'output window, operand 0, single buffered']
    %18 = vsyncpa [#allocation4], 0
    %19 = vsyncpa [#allocation7], 0
    %20 = vsyncpa [#allocation10], 0
    %21 = vsyncpa [#allocation13], 0
    %22 = vsyncpa [#allocation5], 0
    // Predicated region
    $region2: #{tpu_custom_call.1} parent=1 // pred_check
      _
    $region3: #{tpu_custom_call.1} parent=1 // pred_check_branch
      %24 = sbr.rel (0) target = $region5
    $region4: #{tpu_custom_call.1} parent=1 // pred_region
      %26 = vsyncadd [#allocation4], 0
      %s27 = sshll.u32 %s0, 4
      %s28 = int_to_ptr.hbm [resolvable:$true] %s27
      %s29 = sshll.u32 [#allocation3], 4
      %s30 = int_to_ptr.vmem [resolvable:$true] %s29
      %35 = dma.hbm_to_vmem [thread:$0]  %s28, 512, %s30, [#allocation4], 128, 128, 8
    $region5: #{tpu_custom_call.1} parent=1 // pred_fallthru
      _
    // Predicated region
    $region6: #{tpu_custom_call.1} parent=1 // pred_check
      _
    $region7: #{tpu_custom_call.1} parent=1 // pred_check_branch
      %37 = sbr.rel (0) target = $region9
    $region8: #{tpu_custom_call.1} parent=1 // pred_region
      %39 = vsyncadd [#allocation7], 0
      %s40 = sshll.u32 %s1, 4
      %s41 = int_to_ptr.hbm [resolvable:$true] %s40
      %s42 = sshll.u32 [#allocation6], 4
      %s43 = int_to_ptr.vmem [resolvable:$true] %s42
      %48 = dma.hbm_to_vmem [thread:$0]  %s41, 6144, %s43, [#allocation7], 384, 384, 24
    $region9: #{tpu_custom_call.1} parent=1 // pred_fallthru
      _
    // Predicated region
    $region10: #{tpu_custom_call.1} parent=1 // pred_check
      _
    $region11: #{tpu_custom_call.1} parent=1 // pred_check_branch
      %50 = sbr.rel (0) target = $region13
    $region12: #{tpu_custom_call.1} parent=1 // pred_region
      %52 = vsyncadd [#allocation7], 0
      %s54 = sshll.u32 %s2, 4
      %s55 = int_to_ptr.hbm [resolvable:$true] %s54
      %s56 = sshll.u32 [#allocation8], 4
      %s57 = int_to_ptr.vmem [resolvable:$true] %s56
      %59 = dma.hbm_to_vmem [thread:$0]  %s55, 48, %s57, [#allocation7]
    $region13: #{tpu_custom_call.1} parent=1 // pred_fallthru
      _
    // Predicated region
    $region14: #{tpu_custom_call.1} parent=1 // pred_check
      _
    $region15: #{tpu_custom_call.1} parent=1 // pred_check_branch
      %61 = sbr.rel (0) target = $region17
    $region16: #{tpu_custom_call.1} parent=1 // pred_region
      %63 = vsyncadd [#allocation10], 0
      %s64 = sshll.u32 %s3, 4
      %s65 = int_to_ptr.hbm [resolvable:$true] %s64
      %s66 = sshll.u32 [#allocation9], 4
      %s67 = int_to_ptr.vmem [resolvable:$true] %s66
      %72 = dma.hbm_to_vmem [thread:$0]  %s65, 2048, %s67, [#allocation10], 128, 128, 8
    $region17: #{tpu_custom_call.1} parent=1 // pred_fallthru
      _
    // Predicated region
    $region18: #{tpu_custom_call.1} parent=1 // pred_check
      _
    $region19: #{tpu_custom_call.1} parent=1 // pred_check_branch
      %74 = sbr.rel (0) target = $region21
    $region20: #{tpu_custom_call.1} parent=1 // pred_region
      _
    $region21: #{tpu_custom_call.1} parent=1 // pred_fallthru
      _
    // Predicated region
    $region22: #{tpu_custom_call.1} parent=1 // pred_check
      _
    $region23: #{tpu_custom_call.1} parent=1 // pred_check_branch
      %76 = sbr.rel (0) target = $region25
    $region24: #{tpu_custom_call.1} parent=1 // pred_region
      _
    $region25: #{tpu_custom_call.1} parent=1 // pred_fallthru
      _
    // Predicated region
    $region26: #{tpu_custom_call.1} parent=1 // pred_check
      _
    $region27: #{tpu_custom_call.1} parent=1 // pred_check_branch
      %78 = sbr.rel (0) target = $region29
    $region28: #{tpu_custom_call.1} parent=1 // pred_region
      _
    $region29: #{tpu_custom_call.1} parent=1 // pred_fallthru
      _
    // Predicated region
    $region30: #{tpu_custom_call.1} parent=1 // pred_check
      _
    $region31: #{tpu_custom_call.1} parent=1 // pred_check_branch
      %80 = sbr.rel (0) target = $region33
    $region32: #{tpu_custom_call.1} parent=1 // pred_region
      %82 = vsyncadd [#allocation10], 0
      %s83 = sshll.u32 %s7, 4
      %s84 = int_to_ptr.hbm [resolvable:$true] %s83
      %s85 = sshll.u32 [#allocation11], 4
      %s86 = int_to_ptr.vmem [resolvable:$true] %s85
      %91 = dma.hbm_to_vmem [thread:$0]  %s84, 4096, %s86, [#allocation10], 256, 256, 16
    $region33: #{tpu_custom_call.1} parent=1 // pred_fallthru
      _
    // Predicated region
    $region34: #{tpu_custom_call.1} parent=1 // pred_check
      _
    $region35: #{tpu_custom_call.1} parent=1 // pred_check_branch
      %93 = sbr.rel (0) target = $region37
    $region36: #{tpu_custom_call.1} parent=1 // pred_region
      _
    $region37: #{tpu_custom_call.1} parent=1 // pred_fallthru
      _
    // Predicated region
    $region38: #{tpu_custom_call.1} parent=1 // pred_check
      _
    $region39: #{tpu_custom_call.1} parent=1 // pred_check_branch
      %95 = sbr.rel (0) target = $region41
    $region40: #{tpu_custom_call.1} parent=1 // pred_region
      %97 = vsyncadd [#allocation13], 0
      %s98 = sshll.u32 %s9, 4
      %s99 = int_to_ptr.hbm [resolvable:$true] %s98
      %s100 = sshll.u32 [#allocation12], 4
      %s101 = int_to_ptr.vmem [resolvable:$true] %s100
      %106 = dma.hbm_to_vmem [thread:$0]  %s99, 4096, %s101, [#allocation13], 128, 128, 8
    $region41: #{tpu_custom_call.1} parent=1 // pred_fallthru
      _
    // Predicated region
    $region42: #{tpu_custom_call.1} parent=1 // pred_check
      _
    $region43: #{tpu_custom_call.1} parent=1 // pred_check_branch
      %108 = sbr.rel (0) target = $region45
    $region44: #{tpu_custom_call.1} parent=1 // pred_region
      _
    $region45: #{tpu_custom_call.1} parent=1 // pred_fallthru
      _
    // Predicated region
    $region46: #{tpu_custom_call.1} parent=1 // pred_check
      _
    $region47: #{tpu_custom_call.1} parent=1 // pred_check_branch
      %110 = sbr.rel (0) target = $region49
    $region48: #{tpu_custom_call.1} parent=1 // pred_region
      _
    $region49: #{tpu_custom_call.1} parent=1 // pred_fallthru
      _
    // Predicated region
    $region50: #{tpu_custom_call.1} parent=1 // pred_check
      _
    $region51: #{tpu_custom_call.1} parent=1 // pred_check_branch
      %112 = sbr.rel (0) target = $region53
    $region52: #{tpu_custom_call.1} parent=1 // pred_region
      _
    $region53: #{tpu_custom_call.1} parent=1 // pred_fallthru
      _
    // Predicated region
    $region54: #{tpu_custom_call.1} parent=1 // pred_check
      _
    $region55: #{tpu_custom_call.1} parent=1 // pred_check_branch
      %114 = sbr.rel (0) target = $region57
    $region56: #{tpu_custom_call.1} parent=1 // pred_region
      %116 = dma.done [#allocation4], 512
    $region57: #{tpu_custom_call.1} parent=1 // pred_fallthru
      _
    // Predicated region
    $region58: #{tpu_custom_call.1} parent=1 // pred_check
      _
    $region59: #{tpu_custom_call.1} parent=1 // pred_check_branch
      %118 = sbr.rel (0) target = $region61
    $region60: #{tpu_custom_call.1} parent=1 // pred_region
      %120 = dma.done [#allocation7], 6144
    $region61: #{tpu_custom_call.1} parent=1 // pred_fallthru
      _
    // Predicated region
    $region62: #{tpu_custom_call.1} parent=1 // pred_check
      _
    $region63: #{tpu_custom_call.1} parent=1 // pred_check_branch
      %122 = sbr.rel (0) target = $region65
    $region64: #{tpu_custom_call.1} parent=1 // pred_region
      %124 = dma.done [#allocation7], 48
    $region65: #{tpu_custom_call.1} parent=1 // pred_fallthru
      _
    // Predicated region
    $region66: #{tpu_custom_call.1} parent=1 // pred_check
      _
    $region67: #{tpu_custom_call.1} parent=1 // pred_check_branch
      %126 = sbr.rel (0) target = $region69
    $region68: #{tpu_custom_call.1} parent=1 // pred_region
      %128 = dma.done [#allocation10], 2048
    $region69: #{tpu_custom_call.1} parent=1 // pred_fallthru
      _
    // Predicated region
    $region70: #{tpu_custom_call.1} parent=1 // pred_check
      _
    $region71: #{tpu_custom_call.1} parent=1 // pred_check_branch
      %130 = sbr.rel (0) target = $region73
    $region72: #{tpu_custom_call.1} parent=1 // pred_region
      %132 = dma.done [#allocation10], 4096
    $region73: #{tpu_custom_call.1} parent=1 // pred_fallthru
      _
    // Predicated region
    $region74: #{tpu_custom_call.1} parent=1 // pred_check
      _
    $region75: #{tpu_custom_call.1} parent=1 // pred_check_branch
      %134 = sbr.rel (0) target = $region77
    $region76: #{tpu_custom_call.1} parent=1 // pred_region
      %136 = dma.done [#allocation13], 4096
    $region77: #{tpu_custom_call.1} parent=1 // pred_fallthru
      _
    %v137 = vld [vmem:[#allocation3] sm:$0xff]
    %v138 = vld [vmem:[#allocation3 + $0x8] sm:$0xff]
    %v139 = vld [vmem:[#allocation3 + $0x10] sm:$0xff]
    %v140 = vld [vmem:[#allocation3 + $0x18] sm:$0xff]
    %v141 = vld [vmem:[#allocation6] sm:$0xff]
    %v142 = vld [vmem:[#allocation6 + $0x8] sm:$0xff]
    %v143 = vld [vmem:[#allocation6 + $0x10] sm:$0xff]
    %v144 = vld [vmem:[#allocation6 + $0x18] sm:$0xff]
    %v145 = vld [vmem:[#allocation6 + $0x20] sm:$0xff]
    %v146 = vld [vmem:[#allocation6 + $0x28] sm:$0xff]
    %v147 = vld [vmem:[#allocation6 + $0x30] sm:$0xff]
    %v148 = vld [vmem:[#allocation6 + $0x38] sm:$0xff]
    %v149 = vld [vmem:[#allocation6 + $0x40] sm:$0xff]
    %v150 = vld [vmem:[#allocation6 + $0x48] sm:$0xff]
    %v151 = vld [vmem:[#allocation6 + $0x50] sm:$0xff]
    %v152 = vld [vmem:[#allocation6 + $0x58] sm:$0xff]
    %v153 = vld [vmem:[#allocation6 + $0x60] sm:$0xff]
    %v154 = vld [vmem:[#allocation6 + $0x68] sm:$0xff]
    %v155 = vld [vmem:[#allocation6 + $0x70] sm:$0xff]
    %v156 = vld [vmem:[#allocation6 + $0x78] sm:$0xff]
    %v157 = vld [vmem:[#allocation6 + $0x80] sm:$0xff]
    %v158 = vld [vmem:[#allocation6 + $0x88] sm:$0xff]
    %v159 = vld [vmem:[#allocation6 + $0x90] sm:$0xff]
    %v160 = vld [vmem:[#allocation6 + $0x98] sm:$0xff]
    %v161 = vld [vmem:[#allocation6 + $0xa0] sm:$0xff]
    %v162 = vld [vmem:[#allocation6 + $0xa8] sm:$0xff]
    %v163 = vld [vmem:[#allocation6 + $0xb0] sm:$0xff]
    %v164 = vld [vmem:[#allocation6 + $0xb8] sm:$0xff]
    %v165 = vld [vmem:[#allocation6 + $0xc0] sm:$0xff]
    %v166 = vld [vmem:[#allocation6 + $0xc8] sm:$0xff]
    %v167 = vld [vmem:[#allocation6 + $0xd0] sm:$0xff]
    %v168 = vld [vmem:[#allocation6 + $0xd8] sm:$0xff]
    %v169 = vld [vmem:[#allocation6 + $0xe0] sm:$0xff]
    %v170 = vld [vmem:[#allocation6 + $0xe8] sm:$0xff]
    %v171 = vld [vmem:[#allocation6 + $0xf0] sm:$0xff]
    %v172 = vld [vmem:[#allocation6 + $0xf8] sm:$0xff]
    %v173 = vld [vmem:[#allocation6 + $0x100] sm:$0xff]
    %v174 = vld [vmem:[#allocation6 + $0x108] sm:$0xff]
    %v175 = vld [vmem:[#allocation6 + $0x110] sm:$0xff]
    %v176 = vld [vmem:[#allocation6 + $0x118] sm:$0xff]
    %v177 = vld [vmem:[#allocation6 + $0x120] sm:$0xff]
    %v178 = vld [vmem:[#allocation6 + $0x128] sm:$0xff]
    %v179 = vld [vmem:[#allocation6 + $0x130] sm:$0xff]
    %v180 = vld [vmem:[#allocation6 + $0x138] sm:$0xff]
    %v181 = vld [vmem:[#allocation6 + $0x140] sm:$0xff]
    %v182 = vld [vmem:[#allocation6 + $0x148] sm:$0xff]
    %v183 = vld [vmem:[#allocation6 + $0x150] sm:$0xff]
    %v184 = vld [vmem:[#allocation6 + $0x158] sm:$0xff]
    %v185 = vld [vmem:[#allocation6 + $0x160] sm:$0xff]
    %v186 = vld [vmem:[#allocation6 + $0x168] sm:$0xff]
    %v187 = vld [vmem:[#allocation6 + $0x170] sm:$0xff]
    %v188 = vld [vmem:[#allocation6 + $0x178] sm:$0xff]
    %v189 = vld [vmem:[#allocation8] sm:$0x7]
    %v191 = vperm.slane %v189, 0
    %v192 = vperm.slane %v189, 1
    %v193 = vperm.slane %v189, 2
    %197 = vmatpush.msra.mxu0 %v186
    %198 = vmatpush.msra.mxu0 %v183
    %199 = vmatpush.msra.mxu0 %v180
    %200 = vmatpush.msra.mxu0 %v177
    %201 = vmatpush.msra.mxu0 %v174
    %202 = vmatpush.msra.mxu0 %v171
    %203 = vmatpush.msra.mxu0 %v168
    %204 = vmatpush.msra.mxu0 %v165
    %205 = vmatpush.msra.mxu0 %v162
    %206 = vmatpush.msra.mxu0 %v159
    %207 = vmatpush.msra.mxu0 %v156
    %208 = vmatpush.msra.mxu0 %v153
    %209 = vmatpush.msra.mxu0 %v150
    %210 = vmatpush.msra.mxu0 %v147
    %211 = vmatpush.msra.mxu0 %v144
    %212 = vmatpush.msra.mxu0 %v141
    %213 = vmatmul.f32.gmra.mxu0 %v137
    %v214 = vpop.f32.mrf.mxu0
    %v215 = vadd.f32 %v191, %v214
    %216 = vmatmul.f32.gmra.mxu0 %v138
    %v217 = vpop.f32.mrf.mxu0
    %v218 = vadd.f32 %v191, %v217
    %219 = vmatmul.f32.gmra.mxu0 %v139
    %v220 = vpop.f32.mrf.mxu0
    %v221 = vadd.f32 %v191, %v220
    %222 = vmatmul.f32.gmra.mxu0 %v140
    %v223 = vpop.f32.mrf.mxu0
    %v224 = vadd.f32 %v191, %v223
    %225 = vdwg.mxu0
    %226 = vmatpush.msra.mxu0 %v187
    %227 = vmatpush.msra.mxu0 %v184
    %228 = vmatpush.msra.mxu0 %v181
    %229 = vmatpush.msra.mxu0 %v178
    %230 = vmatpush.msra.mxu0 %v175
    %231 = vmatpush.msra.mxu0 %v172
    %232 = vmatpush.msra.mxu0 %v169
    %233 = vmatpush.msra.mxu0 %v166
    %234 = vmatpush.msra.mxu0 %v163
    %235 = vmatpush.msra.mxu0 %v160
    %236 = vmatpush.msra.mxu0 %v157
    %237 = vmatpush.msra.mxu0 %v154
    %238 = vmatpush.msra.mxu0 %v151
    %239 = vmatpush.msra.mxu0 %v148
    %240 = vmatpush.msra.mxu0 %v145
    %241 = vmatpush.msra.mxu0 %v142
    %242 = vmatmul.f32.gmra.mxu0 %v137
    %v243 = vpop.f32.mrf.mxu0
    %v244 = vadd.f32 %v192, %v243
    %245 = vmatmul.f32.gmra.mxu0 %v138
    %v246 = vpop.f32.mrf.mxu0
    %v247 = vadd.f32 %v192, %v246
    %248 = vmatmul.f32.gmra.mxu0 %v139
    %v249 = vpop.f32.mrf.mxu0
    %v250 = vadd.f32 %v192, %v249
    %251 = vmatmul.f32.gmra.mxu0 %v140
    %v252 = vpop.f32.mrf.mxu0
    %v253 = vadd.f32 %v192, %v252
    %254 = vdwg.mxu0
    %255 = vmatpush.msra.mxu0 %v188
    %256 = vmatpush.msra.mxu0 %v185
    %257 = vmatpush.msra.mxu0 %v182
    %258 = vmatpush.msra.mxu0 %v179
    %259 = vmatpush.msra.mxu0 %v176
    %260 = vmatpush.msra.mxu0 %v173
    %261 = vmatpush.msra.mxu0 %v170
    %262 = vmatpush.msra.mxu0 %v167
    %263 = vmatpush.msra.mxu0 %v164
    %264 = vmatpush.msra.mxu0 %v161
    %265 = vmatpush.msra.mxu0 %v158
    %266 = vmatpush.msra.mxu0 %v155
    %267 = vmatpush.msra.mxu0 %v152
    %268 = vmatpush.msra.mxu0 %v149
    %269 = vmatpush.msra.mxu0 %v146
    %270 = vmatpush.msra.mxu0 %v143
    %271 = vmatmul.f32.gmra.mxu0 %v137
    %v272 = vpop.f32.mrf.mxu0
    %v273 = vadd.f32 %v193, %v272
    %274 = vmatmul.f32.gmra.mxu0 %v138
    %v275 = vpop.f32.mrf.mxu0
    %v276 = vadd.f32 %v193, %v275
    %277 = vmatmul.f32.gmra.mxu0 %v139
    %v278 = vpop.f32.mrf.mxu0
    %v279 = vadd.f32 %v193, %v278
    %280 = vmatmul.f32.gmra.mxu0 %v140
    %v281 = vpop.f32.mrf.mxu0
    %v282 = vadd.f32 %v193, %v281
    %283 = vdwg.mxu0
    %v284 = vmul.f32 %v215, 0.17677669
    %v285 = vmul.f32 %v218, 0.17677669
    %v286 = vmul.f32 %v221, 0.17677669
    %v287 = vmul.f32 %v224, 0.17677669
    %vm288 = vcmask 261120
    %v290 = vsel %vm288, %v284, 0
    %v293 = vsel %vm288, %v285, 0
    %v296 = vsel %vm288, %v244, 0
    %v299 = vsel %vm288, %v247, 0
    %301 = vmatpush.xpose.msra.mxu0 0.0
    %302 = vmatpush.xpose.msra.mxu0 0.0
    %303 = vmatpush.xpose.msra.mxu0 0.0
    %304 = vmatpush.xpose.msra.mxu0 0.0
    %305 = vmatpush.xpose.msra.mxu0 0.0
    %306 = vmatpush.xpose.msra.mxu0 0.0
    %307 = vmatpush.xpose.msra.mxu0 0.0
    %308 = vmatpush.xpose.msra.mxu0 0.0
    %309 = vmatpush.xpose.msra.mxu0 0.0
    %310 = vmatpush.xpose.msra.mxu0 0.0
    %311 = vmatpush.xpose.msra.mxu0 0.0
    %312 = vmatpush.xpose.msra.mxu0 0.0
    %313 = vmatpush.xpose.msra.mxu0 0.0
    %314 = vmatpush.xpose.msra.mxu0 0.0
    %315 = vmatpush.xpose.msra.mxu0 %v299
    %316 = vmatpush.xpose.msra.mxu0 %v296
    %317 = vmatmul.f32.gmra.mxu0 %v290
    %v318 = vpop.f32.mrf.mxu0
    %v319 = vadd.f32 0.0, %v318
    %320 = vmatmul.f32.gmra.mxu0 %v293
    %v321 = vpop.f32.mrf.mxu0
    %v322 = vadd.f32 0.0, %v321
    %323 = vdwg.mxu0
    %v325 = vsel %vm288, %v286, 0
    %v328 = vsel %vm288, %v287, 0
    %v331 = vsel %vm288, %v250, 0
    %v334 = vsel %vm288, %v253, 0
    %336 = vmatpush.xpose.msra.mxu0 0.0
    %337 = vmatpush.xpose.msra.mxu0 0.0
    %338 = vmatpush.xpose.msra.mxu0 0.0
    %339 = vmatpush.xpose.msra.mxu0 0.0
    %340 = vmatpush.xpose.msra.mxu0 0.0
    %341 = vmatpush.xpose.msra.mxu0 0.0
    %342 = vmatpush.xpose.msra.mxu0 0.0
    %343 = vmatpush.xpose.msra.mxu0 0.0
    %344 = vmatpush.xpose.msra.mxu0 0.0
    %345 = vmatpush.xpose.msra.mxu0 0.0
    %346 = vmatpush.xpose.msra.mxu0 0.0
    %347 = vmatpush.xpose.msra.mxu0 0.0
    %348 = vmatpush.xpose.msra.mxu0 0.0
    %349 = vmatpush.xpose.msra.mxu0 0.0
    %350 = vmatpush.xpose.msra.mxu0 %v334
    %351 = vmatpush.xpose.msra.mxu0 %v331
    %352 = vmatmul.f32.gmra.mxu0 %v325
    %v353 = vpop.f32.mrf.mxu0
    %v354 = vadd.f32 0.0, %v353
    %355 = vmatmul.f32.gmra.mxu0 %v328
    %v356 = vpop.f32.mrf.mxu0
    %v357 = vadd.f32 0.0, %v356
    %358 = vdwg.mxu0
    %vm359 = vcmask 130048
    %v360 = vsel %vm359, %v319, -inf
    %361 = vmax.xlane.f32.xlu0 %v360
    %v362 = vpop.xlane.xlu0 %361
    %v363 = vsel %vm359, %v322, -inf
    %364 = vmax.xlane.f32.xlu0 %v363
    %v365 = vpop.xlane.xlu0 %364
    %v366 = vsel %vm359, %v354, -inf
    %367 = vmax.xlane.f32.xlu0 %v366
    %v368 = vpop.xlane.xlu0 %367
    %v369 = vsel %vm359, %v357, -inf
    %370 = vmax.xlane.f32.xlu0 %v369
    %v371 = vpop.xlane.xlu0 %370
    %v372 = vsub.f32 %v319, %v362
    %v373 = vsub.f32 %v322, %v365
    %v374 = vsub.f32 %v354, %v368
    %v375 = vsub.f32 %v357, %v371
    %v376 = vmul.f32 %v372, 1.442695
    %v377 = vpow.pop %v376
    %v378 = vmul.f32 %v373, 1.442695
    %v379 = vpow.pop %v378
    %v380 = vmul.f32 %v374, 1.442695
    %v381 = vpow.pop %v380
    %v382 = vmul.f32 %v375, 1.442695
    %v383 = vpow.pop %v382
    %v384 = vsel %vm359, %v377, 0.0
    %385 = vadd.xlane.f32.xlu0 %v384
    %v386 = vpop.xlane.xlu0 %385
    %v387 = vsel %vm359, %v379, 0.0
    %388 = vadd.xlane.f32.xlu0 %v387
    %v389 = vpop.xlane.xlu0 %388
    %v390 = vsel %vm359, %v381, 0.0
    %391 = vadd.xlane.f32.xlu0 %v390
    %v392 = vpop.xlane.xlu0 %391
    %v393 = vsel %vm359, %v383, 0.0
    %394 = vadd.xlane.f32.xlu0 %v393
    %v395 = vpop.xlane.xlu0 %394
    %v396 = vrcp.pop %v386
    %v397 = vmul.f32 %v386, %v396
    %v398 = vsub.f32 1.0, %v397
    %v399 = vmul.f32 %v396, %v398
    %v400 = vadd.f32 %v396, %v399
    %vm401 = vweird.f32 %v386
    %vm402 = vweird.f32 %v396
    %vm403 = vmor %vm401, %vm402
    %v404 = vsel %vm403, %v396, %v400
    %v405 = vand.u32 2147483647, %v386
    %vm406 = vcmp.eq.f32.partialorder %v405, 8.507059e+37
    %v407 = vand.u32 %v386, 2147483648
    %v408 = vor.u32 1.1754944e-38, %v407
    %v409 = vsel %vm406, %v408, %v404
    %v410 = vmul.f32 %v377, %v409
    %v411 = vrcp.pop %v389
    %v412 = vmul.f32 %v389, %v411
    %v413 = vsub.f32 1.0, %v412
    %v414 = vmul.f32 %v411, %v413
    %v415 = vadd.f32 %v411, %v414
    %vm416 = vweird.f32 %v389
    %vm417 = vweird.f32 %v411
    %vm418 = vmor %vm416, %vm417
    %v419 = vsel %vm418, %v411, %v415
    %v420 = vand.u32 2147483647, %v389
    %vm421 = vcmp.eq.f32.partialorder %v420, 8.507059e+37
    %v422 = vand.u32 %v389, 2147483648
    %v423 = vor.u32 1.1754944e-38, %v422
    %v424 = vsel %vm421, %v423, %v419
    %v425 = vmul.f32 %v379, %v424
    %v426 = vrcp.pop %v392
    %v427 = vmul.f32 %v392, %v426
    %v428 = vsub.f32 1.0, %v427
    %v429 = vmul.f32 %v426, %v428
    %v430 = vadd.f32 %v426, %v429
    %vm431 = vweird.f32 %v392
    %vm432 = vweird.f32 %v426
    %vm433 = vmor %vm431, %vm432
    %v434 = vsel %vm433, %v426, %v430
    %v435 = vand.u32 2147483647, %v392
    %vm436 = vcmp.eq.f32.partialorder %v435, 8.507059e+37
    %v437 = vand.u32 %v392, 2147483648
    %v438 = vor.u32 1.1754944e-38, %v437
    %v439 = vsel %vm436, %v438, %v434
    %v440 = vmul.f32 %v381, %v439
    %v441 = vrcp.pop %v395
    %v442 = vmul.f32 %v395, %v441
    %v443 = vsub.f32 1.0, %v442
    %v444 = vmul.f32 %v441, %v443
    %v445 = vadd.f32 %v441, %v444
    %vm446 = vweird.f32 %v395
    %vm447 = vweird.f32 %v441
    %vm448 = vmor %vm446, %vm447
    %v449 = vsel %vm448, %v441, %v445
    %v450 = vand.u32 2147483647, %v395
    %vm451 = vcmp.eq.f32.partialorder %v450, 8.507059e+37
    %v452 = vand.u32 %v395, 2147483648
    %v453 = vor.u32 1.1754944e-38, %v452
    %v454 = vsel %vm451, %v453, %v449
    %v455 = vmul.f32 %v383, %v454
    %v457 = vsel %vm359, %v410, 0
    %v460 = vsel %vm359, %v425, 0
    %462 = vmatpush.msra.mxu0 0.0
    %463 = vmatpush.msra.mxu0 0.0
    %464 = vmatpush.msra.mxu0 0.0
    %465 = vmatpush.msra.mxu0 0.0
    %466 = vmatpush.msra.mxu0 0.0
    %467 = vmatpush.msra.mxu0 0.0
    %468 = vmatpush.msra.mxu0 0.0
    %469 = vmatpush.msra.mxu0 0.0
    %470 = vmatpush.msra.mxu0 0.0
    %471 = vmatpush.msra.mxu0 0.0
    %472 = vmatpush.msra.mxu0 0.0
    %473 = vmatpush.msra.mxu0 0.0
    %474 = vmatpush.msra.mxu0 0.0
    %475 = vmatpush.msra.mxu0 0.0
    %476 = vmatpush.msra.mxu0 %v276
    %477 = vmatpush.msra.mxu0 %v273
    %478 = vmatmul.f32.gmra.mxu0 %v457
    %v479 = vpop.f32.mrf.mxu0
    %v480 = vadd.f32 0.0, %v479
    %481 = vmatmul.f32.gmra.mxu0 %v460
    %v482 = vpop.f32.mrf.mxu0
    %v483 = vadd.f32 0.0, %v482
    %484 = vdwg.mxu0
    %v486 = vsel %vm359, %v440, 0
    %v489 = vsel %vm359, %v455, 0
    %491 = vmatpush.msra.mxu0 0.0
    %492 = vmatpush.msra.mxu0 0.0
    %493 = vmatpush.msra.mxu0 0.0
    %494 = vmatpush.msra.mxu0 0.0
    %495 = vmatpush.msra.mxu0 0.0
    %496 = vmatpush.msra.mxu0 0.0
    %497 = vmatpush.msra.mxu0 0.0
    %498 = vmatpush.msra.mxu0 0.0
    %499 = vmatpush.msra.mxu0 0.0
    %500 = vmatpush.msra.mxu0 0.0
    %501 = vmatpush.msra.mxu0 0.0
    %502 = vmatpush.msra.mxu0 0.0
    %503 = vmatpush.msra.mxu0 0.0
    %504 = vmatpush.msra.mxu0 0.0
    %505 = vmatpush.msra.mxu0 %v282
    %506 = vmatpush.msra.mxu0 %v279
    %507 = vmatmul.f32.gmra.mxu0 %v486
    %v508 = vpop.f32.mrf.mxu0
    %v509 = vadd.f32 0.0, %v508
    %510 = vmatmul.f32.gmra.mxu0 %v489
    %v511 = vpop.f32.mrf.mxu0
    %v512 = vadd.f32 0.0, %v511
    %513 = vdwg.mxu0
    %514 = vst.msk [vmem:[#allocation2] sm:$0xff] %vm288, %v480
    %515 = vst.msk [vmem:[#allocation2 + $0x8] sm:$0xff] %vm288, %v483
    %516 = vst.msk [vmem:[#allocation2 + $0x10] sm:$0xff] %vm288, %v509
    %517 = vst.msk [vmem:[#allocation2 + $0x18] sm:$0xff] %vm288, %v512
    %518 = vrot.lane.b32.xlu0 %v284, 96
    %v519 = vpop.permute.xlu0 %518
    %520 = vrot.lane.b32.xlu0 %v285, 96
    %v521 = vpop.permute.xlu0 %520
    %522 = vrot.lane.b32.xlu0 %v244, 96
    %v523 = vpop.permute.xlu0 %522
    %524 = vrot.lane.b32.xlu0 %v247, 96
    %v525 = vpop.permute.xlu0 %524
    %v526 = vsel %vm288, %v519, 0
    %v528 = vsel %vm288, %v521, 0
    %v530 = vsel %vm288, %v523, 0
    %v532 = vsel %vm288, %v525, 0
    %534 = vmatpush.xpose.msra.mxu0 0.0
    %535 = vmatpush.xpose.msra.mxu0 0.0
    %536 = vmatpush.xpose.msra.mxu0 0.0
    %537 = vmatpush.xpose.msra.mxu0 0.0
    %538 = vmatpush.xpose.msra.mxu0 0.0
    %539 = vmatpush.xpose.msra.mxu0 0.0
    %540 = vmatpush.xpose.msra.mxu0 0.0
    %541 = vmatpush.xpose.msra.mxu0 0.0
    %542 = vmatpush.xpose.msra.mxu0 0.0
    %543 = vmatpush.xpose.msra.mxu0 0.0
    %544 = vmatpush.xpose.msra.mxu0 0.0
    %545 = vmatpush.xpose.msra.mxu0 0.0
    %546 = vmatpush.xpose.msra.mxu0 0.0
    %547 = vmatpush.xpose.msra.mxu0 0.0
    %548 = vmatpush.xpose.msra.mxu0 %v532
    %549 = vmatpush.xpose.msra.mxu0 %v530
    %550 = vmatmul.f32.gmra.mxu0 %v526
    %v551 = vpop.f32.mrf.mxu0
    %v552 = vadd.f32 0.0, %v551
    %553 = vmatmul.f32.gmra.mxu0 %v528
    %v554 = vpop.f32.mrf.mxu0
    %v555 = vadd.f32 0.0, %v554
    %556 = vdwg.mxu0
    %557 = vrot.lane.b32.xlu0 %v286, 96
    %v558 = vpop.permute.xlu0 %557
    %559 = vrot.lane.b32.xlu0 %v287, 96
    %v560 = vpop.permute.xlu0 %559
    %561 = vrot.lane.b32.xlu0 %v250, 96
    %v562 = vpop.permute.xlu0 %561
    %563 = vrot.lane.b32.xlu0 %v253, 96
    %v564 = vpop.permute.xlu0 %563
    %v565 = vsel %vm288, %v558, 0
    %v567 = vsel %vm288, %v560, 0
    %v569 = vsel %vm288, %v562, 0
    %v571 = vsel %vm288, %v564, 0
    %573 = vmatpush.xpose.msra.mxu0 0.0
    %574 = vmatpush.xpose.msra.mxu0 0.0
    %575 = vmatpush.xpose.msra.mxu0 0.0
    %576 = vmatpush.xpose.msra.mxu0 0.0
    %577 = vmatpush.xpose.msra.mxu0 0.0
    %578 = vmatpush.xpose.msra.mxu0 0.0
    %579 = vmatpush.xpose.msra.mxu0 0.0
    %580 = vmatpush.xpose.msra.mxu0 0.0
    %581 = vmatpush.xpose.msra.mxu0 0.0
    %582 = vmatpush.xpose.msra.mxu0 0.0
    %583 = vmatpush.xpose.msra.mxu0 0.0
    %584 = vmatpush.xpose.msra.mxu0 0.0
    %585 = vmatpush.xpose.msra.mxu0 0.0
    %586 = vmatpush.xpose.msra.mxu0 0.0
    %587 = vmatpush.xpose.msra.mxu0 %v571
    %588 = vmatpush.xpose.msra.mxu0 %v569
    %589 = vmatmul.f32.gmra.mxu0 %v565
    %v590 = vpop.f32.mrf.mxu0
    %v591 = vadd.f32 0.0, %v590
    %592 = vmatmul.f32.gmra.mxu0 %v567
    %v593 = vpop.f32.mrf.mxu0
    %v594 = vadd.f32 0.0, %v593
    %595 = vdwg.mxu0
    %v596 = vsel %vm359, %v552, -inf
    %597 = vmax.xlane.f32.xlu0 %v596
    %v598 = vpop.xlane.xlu0 %597
    %v599 = vsel %vm359, %v555, -inf
    %600 = vmax.xlane.f32.xlu0 %v599
    %v601 = vpop.xlane.xlu0 %600
    %v602 = vsel %vm359, %v591, -inf
    %603 = vmax.xlane.f32.xlu0 %v602
    %v604 = vpop.xlane.xlu0 %603
    %v605 = vsel %vm359, %v594, -inf
    %606 = vmax.xlane.f32.xlu0 %v605
    %v607 = vpop.xlane.xlu0 %606
    %v608 = vsub.f32 %v552, %v598
    %v609 = vsub.f32 %v555, %v601
    %v610 = vsub.f32 %v591, %v604
    %v611 = vsub.f32 %v594, %v607
    %v612 = vmul.f32 %v608, 1.442695
    %v613 = vpow.pop %v612
    %v614 = vmul.f32 %v609, 1.442695
    %v615 = vpow.pop %v614
    %v616 = vmul.f32 %v610, 1.442695
    %v617 = vpow.pop %v616
    %v618 = vmul.f32 %v611, 1.442695
    %v619 = vpow.pop %v618
    %v620 = vsel %vm359, %v613, 0.0
    %621 = vadd.xlane.f32.xlu0 %v620
    %v622 = vpop.xlane.xlu0 %621
    %v623 = vsel %vm359, %v615, 0.0
    %624 = vadd.xlane.f32.xlu0 %v623
    %v625 = vpop.xlane.xlu0 %624
    %v626 = vsel %vm359, %v617, 0.0
    %627 = vadd.xlane.f32.xlu0 %v626
    %v628 = vpop.xlane.xlu0 %627
    %v629 = vsel %vm359, %v619, 0.0
    %630 = vadd.xlane.f32.xlu0 %v629
    %v631 = vpop.xlane.xlu0 %630
    %v632 = vrcp.pop %v622
    %v633 = vmul.f32 %v622, %v632
    %v634 = vsub.f32 1.0, %v633
    %v635 = vmul.f32 %v632, %v634
    %v636 = vadd.f32 %v632, %v635
    %vm637 = vweird.f32 %v622
    %vm638 = vweird.f32 %v632
    %vm639 = vmor %vm637, %vm638
    %v640 = vsel %vm639, %v632, %v636
    %v641 = vand.u32 2147483647, %v622
    %vm642 = vcmp.eq.f32.partialorder %v641, 8.507059e+37
    %v643 = vand.u32 %v622, 2147483648
    %v644 = vor.u32 1.1754944e-38, %v643
    %v645 = vsel %vm642, %v644, %v640
    %v646 = vmul.f32 %v613, %v645
    %v647 = vrcp.pop %v625
    %v648 = vmul.f32 %v625, %v647
    %v649 = vsub.f32 1.0, %v648
    %v650 = vmul.f32 %v647, %v649
    %v651 = vadd.f32 %v647, %v650
    %vm652 = vweird.f32 %v625
    %vm653 = vweird.f32 %v647
    %vm654 = vmor %vm652, %vm653
    %v655 = vsel %vm654, %v647, %v651
    %v656 = vand.u32 2147483647, %v625
    %vm657 = vcmp.eq.f32.partialorder %v656, 8.507059e+37
    %v658 = vand.u32 %v625, 2147483648
    %v659 = vor.u32 1.1754944e-38, %v658
    %v660 = vsel %vm657, %v659, %v655
    %v661 = vmul.f32 %v615, %v660
    %v662 = vrcp.pop %v628
    %v663 = vmul.f32 %v628, %v662
    %v664 = vsub.f32 1.0, %v663
    %v665 = vmul.f32 %v662, %v664
    %v666 = vadd.f32 %v662, %v665
    %vm667 = vweird.f32 %v628
    %vm668 = vweird.f32 %v662
    %vm669 = vmor %vm667, %vm668
    %v670 = vsel %vm669, %v662, %v666
    %v671 = vand.u32 2147483647, %v628
    %vm672 = vcmp.eq.f32.partialorder %v671, 8.507059e+37
    %v673 = vand.u32 %v628, 2147483648
    %v674 = vor.u32 1.1754944e-38, %v673
    %v675 = vsel %vm672, %v674, %v670
    %v676 = vmul.f32 %v617, %v675
    %v677 = vrcp.pop %v631
    %v678 = vmul.f32 %v631, %v677
    %v679 = vsub.f32 1.0, %v678
    %v680 = vmul.f32 %v677, %v679
    %v681 = vadd.f32 %v677, %v680
    %vm682 = vweird.f32 %v631
    %vm683 = vweird.f32 %v677
    %vm684 = vmor %vm682, %vm683
    %v685 = vsel %vm684, %v677, %v681
    %v686 = vand.u32 2147483647, %v631
    %vm687 = vcmp.eq.f32.partialorder %v686, 8.507059e+37
    %v688 = vand.u32 %v631, 2147483648
    %v689 = vor.u32 1.1754944e-38, %v688
    %v690 = vsel %vm687, %v689, %v685
    %v691 = vmul.f32 %v619, %v690
    %694 = vrot.lane.b32.xlu0 %v273, 96
    %v695 = vpop.permute.xlu0 %694
    %696 = vrot.lane.b32.xlu0 %v276, 96
    %v697 = vpop.permute.xlu0 %696
    %v701 = vsel %vm359, %v646, 0
    %v704 = vsel %vm359, %v661, 0
    %706 = vmatpush.msra.mxu0 0.0
    %707 = vmatpush.msra.mxu0 0.0
    %708 = vmatpush.msra.mxu0 0.0
    %709 = vmatpush.msra.mxu0 0.0
    %710 = vmatpush.msra.mxu0 0.0
    %711 = vmatpush.msra.mxu0 0.0
    %712 = vmatpush.msra.mxu0 0.0
    %713 = vmatpush.msra.mxu0 0.0
    %714 = vmatpush.msra.mxu0 0.0
    %715 = vmatpush.msra.mxu0 0.0
    %716 = vmatpush.msra.mxu0 0.0
    %717 = vmatpush.msra.mxu0 0.0
    %718 = vmatpush.msra.mxu0 0.0
    %719 = vmatpush.msra.mxu0 0.0
    %720 = vmatpush.msra.mxu0 %v697
    %721 = vmatpush.msra.mxu0 %v695
    %722 = vmatmul.f32.gmra.mxu0 %v701
    %v723 = vpop.f32.mrf.mxu0
    %v724 = vadd.f32 0.0, %v723
    %725 = vmatmul.f32.gmra.mxu0 %v704
    %v726 = vpop.f32.mrf.mxu0
    %v727 = vadd.f32 0.0, %v726
    %728 = vdwg.mxu0
    %731 = vrot.lane.b32.xlu0 %v279, 96
    %v732 = vpop.permute.xlu0 %731
    %733 = vrot.lane.b32.xlu0 %v282, 96
    %v734 = vpop.permute.xlu0 %733
    %v738 = vsel %vm359, %v676, 0
    %v741 = vsel %vm359, %v691, 0
    %743 = vmatpush.msra.mxu0 0.0
    %744 = vmatpush.msra.mxu0 0.0
    %745 = vmatpush.msra.mxu0 0.0
    %746 = vmatpush.msra.mxu0 0.0
    %747 = vmatpush.msra.mxu0 0.0
    %748 = vmatpush.msra.mxu0 0.0
    %749 = vmatpush.msra.mxu0 0.0
    %750 = vmatpush.msra.mxu0 0.0
    %751 = vmatpush.msra.mxu0 0.0
    %752 = vmatpush.msra.mxu0 0.0
    %753 = vmatpush.msra.mxu0 0.0
    %754 = vmatpush.msra.mxu0 0.0
    %755 = vmatpush.msra.mxu0 0.0
    %756 = vmatpush.msra.mxu0 0.0
    %757 = vmatpush.msra.mxu0 %v734
    %758 = vmatpush.msra.mxu0 %v732
    %759 = vmatmul.f32.gmra.mxu0 %v738
    %v760 = vpop.f32.mrf.mxu0
    %v761 = vadd.f32 0.0, %v760
    %762 = vmatmul.f32.gmra.mxu0 %v741
    %v763 = vpop.f32.mrf.mxu0
    %v764 = vadd.f32 0.0, %v763
    %765 = vdwg.mxu0
    %770 = vrot.lane.b32.xlu0 %v724, 32
    %v771 = vpop.permute.xlu0 %770
    %772 = vrot.lane.b32.xlu0 %v727, 32
    %v773 = vpop.permute.xlu0 %772
    %774 = vrot.lane.b32.xlu0 %v761, 32
    %v775 = vpop.permute.xlu0 %774
    %776 = vrot.lane.b32.xlu0 %v764, 32
    %v777 = vpop.permute.xlu0 %776
    %vm782 = vcmask 523520
    %783 = vst.msk [vmem:[#allocation2] sm:$0xff] %vm782, %v771
    %784 = vst.msk [vmem:[#allocation2 + $0x8] sm:$0xff] %vm782, %v773
    %785 = vst.msk [vmem:[#allocation2 + $0x10] sm:$0xff] %vm782, %v775
    %786 = vst.msk [vmem:[#allocation2 + $0x18] sm:$0xff] %vm782, %v777
    %787 = vrot.lane.b32.xlu0 %v284, 64
    %v788 = vpop.permute.xlu0 %787
    %789 = vrot.lane.b32.xlu0 %v285, 64
    %v790 = vpop.permute.xlu0 %789
    %791 = vrot.lane.b32.xlu0 %v244, 64
    %v792 = vpop.permute.xlu0 %791
    %793 = vrot.lane.b32.xlu0 %v247, 64
    %v794 = vpop.permute.xlu0 %793
    %v795 = vsel %vm288, %v788, 0
    %v797 = vsel %vm288, %v790, 0
    %v799 = vsel %vm288, %v792, 0
    %v801 = vsel %vm288, %v794, 0
    %803 = vmatpush.xpose.msra.mxu0 0.0
    %804 = vmatpush.xpose.msra.mxu0 0.0
    %805 = vmatpush.xpose.msra.mxu0 0.0
    %806 = vmatpush.xpose.msra.mxu0 0.0
    %807 = vmatpush.xpose.msra.mxu0 0.0
    %808 = vmatpush.xpose.msra.mxu0 0.0
    %809 = vmatpush.xpose.msra.mxu0 0.0
    %810 = vmatpush.xpose.msra.mxu0 0.0
    %811 = vmatpush.xpose.msra.mxu0 0.0
    %812 = vmatpush.xpose.msra.mxu0 0.0
    %813 = vmatpush.xpose.msra.mxu0 0.0
    %814 = vmatpush.xpose.msra.mxu0 0.0
    %815 = vmatpush.xpose.msra.mxu0 0.0
    %816 = vmatpush.xpose.msra.mxu0 0.0
    %817 = vmatpush.xpose.msra.mxu0 %v801
    %818 = vmatpush.xpose.msra.mxu0 %v799
    %819 = vmatmul.f32.gmra.mxu0 %v795
    %v820 = vpop.f32.mrf.mxu0
    %v821 = vadd.f32 0.0, %v820
    %822 = vmatmul.f32.gmra.mxu0 %v797
    %v823 = vpop.f32.mrf.mxu0
    %v824 = vadd.f32 0.0, %v823
    %825 = vdwg.mxu0
    %826 = vrot.lane.b32.xlu0 %v286, 64
    %v827 = vpop.permute.xlu0 %826
    %828 = vrot.lane.b32.xlu0 %v287, 64
    %v829 = vpop.permute.xlu0 %828
    %830 = vrot.lane.b32.xlu0 %v250, 64
    %v831 = vpop.permute.xlu0 %830
    %832 = vrot.lane.b32.xlu0 %v253, 64
    %v833 = vpop.permute.xlu0 %832
    %v834 = vsel %vm288, %v827, 0
    %v836 = vsel %vm288, %v829, 0
    %v838 = vsel %vm288, %v831, 0
    %v840 = vsel %vm288, %v833, 0
    %842 = vmatpush.xpose.msra.mxu0 0.0
    %843 = vmatpush.xpose.msra.mxu0 0.0
    %844 = vmatpush.xpose.msra.mxu0 0.0
    %845 = vmatpush.xpose.msra.mxu0 0.0
    %846 = vmatpush.xpose.msra.mxu0 0.0
    %847 = vmatpush.xpose.msra.mxu0 0.0
    %848 = vmatpush.xpose.msra.mxu0 0.0
    %849 = vmatpush.xpose.msra.mxu0 0.0
    %850 = vmatpush.xpose.msra.mxu0 0.0
    %851 = vmatpush.xpose.msra.mxu0 0.0
    %852 = vmatpush.xpose.msra.mxu0 0.0
    %853 = vmatpush.xpose.msra.mxu0 0.0
    %854 = vmatpush.xpose.msra.mxu0 0.0
    %855 = vmatpush.xpose.msra.mxu0 0.0
    %856 = vmatpush.xpose.msra.mxu0 %v840
    %857 = vmatpush.xpose.msra.mxu0 %v838
    %858 = vmatmul.f32.gmra.mxu0 %v834
    %v859 = vpop.f32.mrf.mxu0
    %v860 = vadd.f32 0.0, %v859
    %861 = vmatmul.f32.gmra.mxu0 %v836
    %v862 = vpop.f32.mrf.mxu0
    %v863 = vadd.f32 0.0, %v862
    %864 = vdwg.mxu0
    %v865 = vsel %vm359, %v821, -inf
    %866 = vmax.xlane.f32.xlu0 %v865
    %v867 = vpop.xlane.xlu0 %866
    %v868 = vsel %vm359, %v824, -inf
    %869 = vmax.xlane.f32.xlu0 %v868
    %v870 = vpop.xlane.xlu0 %869
    %v871 = vsel %vm359, %v860, -inf
    %872 = vmax.xlane.f32.xlu0 %v871
    %v873 = vpop.xlane.xlu0 %872
    %v874 = vsel %vm359, %v863, -inf
    %875 = vmax.xlane.f32.xlu0 %v874
    %v876 = vpop.xlane.xlu0 %875
    %v877 = vsub.f32 %v821, %v867
    %v878 = vsub.f32 %v824, %v870
    %v879 = vsub.f32 %v860, %v873
    %v880 = vsub.f32 %v863, %v876
    %v881 = vmul.f32 %v877, 1.442695
    %v882 = vpow.pop %v881
    %v883 = vmul.f32 %v878, 1.442695
    %v884 = vpow.pop %v883
    %v885 = vmul.f32 %v879, 1.442695
    %v886 = vpow.pop %v885
    %v887 = vmul.f32 %v880, 1.442695
    %v888 = vpow.pop %v887
    %v889 = vsel %vm359, %v882, 0.0
    %890 = vadd.xlane.f32.xlu0 %v889
    %v891 = vpop.xlane.xlu0 %890
    %v892 = vsel %vm359, %v884, 0.0
    %893 = vadd.xlane.f32.xlu0 %v892
    %v894 = vpop.xlane.xlu0 %893
    %v895 = vsel %vm359, %v886, 0.0
    %896 = vadd.xlane.f32.xlu0 %v895
    %v897 = vpop.xlane.xlu0 %896
    %v898 = vsel %vm359, %v888, 0.0
    %899 = vadd.xlane.f32.xlu0 %v898
    %v900 = vpop.xlane.xlu0 %899
    %v901 = vrcp.pop %v891
    %v902 = vmul.f32 %v891, %v901
    %v903 = vsub.f32 1.0, %v902
    %v904 = vmul.f32 %v901, %v903
    %v905 = vadd.f32 %v901, %v904
    %vm906 = vweird.f32 %v891
    %vm907 = vweird.f32 %v901
    %vm908 = vmor %vm906, %vm907
    %v909 = vsel %vm908, %v901, %v905
    %v910 = vand.u32 2147483647, %v891
    %vm911 = vcmp.eq.f32.partialorder %v910, 8.507059e+37
    %v912 = vand.u32 %v891, 2147483648
    %v913 = vor.u32 1.1754944e-38, %v912
    %v914 = vsel %vm911, %v913, %v909
    %v915 = vmul.f32 %v882, %v914
    %v916 = vrcp.pop %v894
    %v917 = vmul.f32 %v894, %v916
    %v918 = vsub.f32 1.0, %v917
    %v919 = vmul.f32 %v916, %v918
    %v920 = vadd.f32 %v916, %v919
    %vm921 = vweird.f32 %v894
    %vm922 = vweird.f32 %v916
    %vm923 = vmor %vm921, %vm922
    %v924 = vsel %vm923, %v916, %v920
    %v925 = vand.u32 2147483647, %v894
    %vm926 = vcmp.eq.f32.partialorder %v925, 8.507059e+37
    %v927 = vand.u32 %v894, 2147483648
    %v928 = vor.u32 1.1754944e-38, %v927
    %v929 = vsel %vm926, %v928, %v924
    %v930 = vmul.f32 %v884, %v929
    %v931 = vrcp.pop %v897
    %v932 = vmul.f32 %v897, %v931
    %v933 = vsub.f32 1.0, %v932
    %v934 = vmul.f32 %v931, %v933
    %v935 = vadd.f32 %v931, %v934
    %vm936 = vweird.f32 %v897
    %vm937 = vweird.f32 %v931
    %vm938 = vmor %vm936, %vm937
    %v939 = vsel %vm938, %v931, %v935
    %v940 = vand.u32 2147483647, %v897
    %vm941 = vcmp.eq.f32.partialorder %v940, 8.507059e+37
    %v942 = vand.u32 %v897, 2147483648
    %v943 = vor.u32 1.1754944e-38, %v942
    %v944 = vsel %vm941, %v943, %v939
    %v945 = vmul.f32 %v886, %v944
    %v946 = vrcp.pop %v900
    %v947 = vmul.f32 %v900, %v946
    %v948 = vsub.f32 1.0, %v947
    %v949 = vmul.f32 %v946, %v948
    %v950 = vadd.f32 %v946, %v949
    %vm951 = vweird.f32 %v900
    %vm952 = vweird.f32 %v946
    %vm953 = vmor %vm951, %vm952
    %v954 = vsel %vm953, %v946, %v950
    %v955 = vand.u32 2147483647, %v900
    %vm956 = vcmp.eq.f32.partialorder %v955, 8.507059e+37
    %v957 = vand.u32 %v900, 2147483648
    %v958 = vor.u32 1.1754944e-38, %v957
    %v959 = vsel %vm956, %v958, %v954
    %v960 = vmul.f32 %v888, %v959
    %961 = vrot.lane.b32.xlu0 %v273, 64
    %v962 = vpop.permute.xlu0 %961
    %963 = vrot.lane.b32.xlu0 %v276, 64
    %v964 = vpop.permute.xlu0 %963
    %v968 = vsel %vm359, %v915, 0
    %v971 = vsel %vm359, %v930, 0
    %973 = vmatpush.msra.mxu0 0.0
    %974 = vmatpush.msra.mxu0 0.0
    %975 = vmatpush.msra.mxu0 0.0
    %976 = vmatpush.msra.mxu0 0.0
    %977 = vmatpush.msra.mxu0 0.0
    %978 = vmatpush.msra.mxu0 0.0
    %979 = vmatpush.msra.mxu0 0.0
    %980 = vmatpush.msra.mxu0 0.0
    %981 = vmatpush.msra.mxu0 0.0
    %982 = vmatpush.msra.mxu0 0.0
    %983 = vmatpush.msra.mxu0 0.0
    %984 = vmatpush.msra.mxu0 0.0
    %985 = vmatpush.msra.mxu0 0.0
    %986 = vmatpush.msra.mxu0 0.0
    %987 = vmatpush.msra.mxu0 %v964
    %988 = vmatpush.msra.mxu0 %v962
    %989 = vmatmul.f32.gmra.mxu0 %v968
    %v990 = vpop.f32.mrf.mxu0
    %v991 = vadd.f32 0.0, %v990
    %992 = vmatmul.f32.gmra.mxu0 %v971
    %v993 = vpop.f32.mrf.mxu0
    %v994 = vadd.f32 0.0, %v993
    %995 = vdwg.mxu0
    %996 = vrot.lane.b32.xlu0 %v279, 64
    %v997 = vpop.permute.xlu0 %996
    %998 = vrot.lane.b32.xlu0 %v282, 64
    %v999 = vpop.permute.xlu0 %998
    %v1003 = vsel %vm359, %v945, 0
    %v1006 = vsel %vm359, %v960, 0
    %1008 = vmatpush.msra.mxu0 0.0
    %1009 = vmatpush.msra.mxu0 0.0
    %1010 = vmatpush.msra.mxu0 0.0
    %1011 = vmatpush.msra.mxu0 0.0
    %1012 = vmatpush.msra.mxu0 0.0
    %1013 = vmatpush.msra.mxu0 0.0
    %1014 = vmatpush.msra.mxu0 0.0
    %1015 = vmatpush.msra.mxu0 0.0
    %1016 = vmatpush.msra.mxu0 0.0
    %1017 = vmatpush.msra.mxu0 0.0
    %1018 = vmatpush.msra.mxu0 0.0
    %1019 = vmatpush.msra.mxu0 0.0
    %1020 = vmatpush.msra.mxu0 0.0
    %1021 = vmatpush.msra.mxu0 0.0
    %1022 = vmatpush.msra.mxu0 %v999
    %1023 = vmatpush.msra.mxu0 %v997
    %1024 = vmatmul.f32.gmra.mxu0 %v1003
    %v1025 = vpop.f32.mrf.mxu0
    %v1026 = vadd.f32 0.0, %v1025
    %1027 = vmatmul.f32.gmra.mxu0 %v1006
    %v1028 = vpop.f32.mrf.mxu0
    %v1029 = vadd.f32 0.0, %v1028
    %1030 = vdwg.mxu0
    %1035 = vrot.lane.b32.xlu0 %v991, 64
    %v1036 = vpop.permute.xlu0 %1035
    %1037 = vrot.lane.b32.xlu0 %v994, 64
    %v1038 = vpop.permute.xlu0 %1037
    %1039 = vrot.lane.b32.xlu0 %v1026, 64
    %v1040 = vpop.permute.xlu0 %1039
    %1041 = vrot.lane.b32.xlu0 %v1029, 64
    %v1042 = vpop.permute.xlu0 %1041
    %vm1047 = vcmask 785920
    %1048 = vst.msk [vmem:[#allocation2] sm:$0xff] %vm1047, %v1036
    %1049 = vst.msk [vmem:[#allocation2 + $0x8] sm:$0xff] %vm1047, %v1038
    %1050 = vst.msk [vmem:[#allocation2 + $0x10] sm:$0xff] %vm1047, %v1040
    %1051 = vst.msk [vmem:[#allocation2 + $0x18] sm:$0xff] %vm1047, %v1042
    %1052 = vrot.lane.b32.xlu0 %v284, 32
    %v1053 = vpop.permute.xlu0 %1052
    %1054 = vrot.lane.b32.xlu0 %v285, 32
    %v1055 = vpop.permute.xlu0 %1054
    %1056 = vrot.lane.b32.xlu0 %v244, 32
    %v1057 = vpop.permute.xlu0 %1056
    %1058 = vrot.lane.b32.xlu0 %v247, 32
    %v1059 = vpop.permute.xlu0 %1058
    %v1060 = vsel %vm288, %v1053, 0
    %v1062 = vsel %vm288, %v1055, 0
    %v1064 = vsel %vm288, %v1057, 0
    %v1066 = vsel %vm288, %v1059, 0
    %1068 = vmatpush.xpose.msra.mxu0 0.0
    %1069 = vmatpush.xpose.msra.mxu0 0.0
    %1070 = vmatpush.xpose.msra.mxu0 0.0
    %1071 = vmatpush.xpose.msra.mxu0 0.0
    %1072 = vmatpush.xpose.msra.mxu0 0.0
    %1073 = vmatpush.xpose.msra.mxu0 0.0
    %1074 = vmatpush.xpose.msra.mxu0 0.0
    %1075 = vmatpush.xpose.msra.mxu0 0.0
    %1076 = vmatpush.xpose.msra.mxu0 0.0
    %1077 = vmatpush.xpose.msra.mxu0 0.0
    %1078 = vmatpush.xpose.msra.mxu0 0.0
    %1079 = vmatpush.xpose.msra.mxu0 0.0
    %1080 = vmatpush.xpose.msra.mxu0 0.0
    %1081 = vmatpush.xpose.msra.mxu0 0.0
    %1082 = vmatpush.xpose.msra.mxu0 %v1066
    %1083 = vmatpush.xpose.msra.mxu0 %v1064
    %1084 = vmatmul.f32.gmra.mxu0 %v1060
    %v1085 = vpop.f32.mrf.mxu0
    %v1086 = vadd.f32 0.0, %v1085
    %1087 = vmatmul.f32.gmra.mxu0 %v1062
    %v1088 = vpop.f32.mrf.mxu0
    %v1089 = vadd.f32 0.0, %v1088
    %1090 = vdwg.mxu0
    %1091 = vrot.lane.b32.xlu0 %v286, 32
    %v1092 = vpop.permute.xlu0 %1091
    %1093 = vrot.lane.b32.xlu0 %v287, 32
    %v1094 = vpop.permute.xlu0 %1093
    %1095 = vrot.lane.b32.xlu0 %v250, 32
    %v1096 = vpop.permute.xlu0 %1095
    %1097 = vrot.lane.b32.xlu0 %v253, 32
    %v1098 = vpop.permute.xlu0 %1097
    %v1099 = vsel %vm288, %v1092, 0
    %v1101 = vsel %vm288, %v1094, 0
    %v1103 = vsel %vm288, %v1096, 0
    %v1105 = vsel %vm288, %v1098, 0
    %1107 = vmatpush.xpose.msra.mxu0 0.0
    %1108 = vmatpush.xpose.msra.mxu0 0.0
    %1109 = vmatpush.xpose.msra.mxu0 0.0
    %1110 = vmatpush.xpose.msra.mxu0 0.0
    %1111 = vmatpush.xpose.msra.mxu0 0.0
    %1112 = vmatpush.xpose.msra.mxu0 0.0
    %1113 = vmatpush.xpose.msra.mxu0 0.0
    %1114 = vmatpush.xpose.msra.mxu0 0.0
    %1115 = vmatpush.xpose.msra.mxu0 0.0
    %1116 = vmatpush.xpose.msra.mxu0 0.0
    %1117 = vmatpush.xpose.msra.mxu0 0.0
    %1118 = vmatpush.xpose.msra.mxu0 0.0
    %1119 = vmatpush.xpose.msra.mxu0 0.0
    %1120 = vmatpush.xpose.msra.mxu0 0.0
    %1121 = vmatpush.xpose.msra.mxu0 %v1105
    %1122 = vmatpush.xpose.msra.mxu0 %v1103
    %1123 = vmatmul.f32.gmra.mxu0 %v1099
    %v1124 = vpop.f32.mrf.mxu0
    %v1125 = vadd.f32 0.0, %v1124
    %1126 = vmatmul.f32.gmra.mxu0 %v1101
    %v1127 = vpop.f32.mrf.mxu0
    %v1128 = vadd.f32 0.0, %v1127
    %1129 = vdwg.mxu0
    %v1130 = vsel %vm359, %v1086, -inf
    %1131 = vmax.xlane.f32.xlu0 %v1130
    %v1132 = vpop.xlane.xlu0 %1131
    %v1133 = vsel %vm359, %v1089, -inf
    %1134 = vmax.xlane.f32.xlu0 %v1133
    %v1135 = vpop.xlane.xlu0 %1134
    %v1136 = vsel %vm359, %v1125, -inf
    %1137 = vmax.xlane.f32.xlu0 %v1136
    %v1138 = vpop.xlane.xlu0 %1137
    %v1139 = vsel %vm359, %v1128, -inf
    %1140 = vmax.xlane.f32.xlu0 %v1139
    %v1141 = vpop.xlane.xlu0 %1140
    %v1142 = vsub.f32 %v1086, %v1132
    %v1143 = vsub.f32 %v1089, %v1135
    %v1144 = vsub.f32 %v1125, %v1138
    %v1145 = vsub.f32 %v1128, %v1141
    %v1146 = vmul.f32 %v1142, 1.442695
    %v1147 = vpow.pop %v1146
    %v1148 = vmul.f32 %v1143, 1.442695
    %v1149 = vpow.pop %v1148
    %v1150 = vmul.f32 %v1144, 1.442695
    %v1151 = vpow.pop %v1150
    %v1152 = vmul.f32 %v1145, 1.442695
    %v1153 = vpow.pop %v1152
    %v1154 = vsel %vm359, %v1147, 0.0
    %1155 = vadd.xlane.f32.xlu0 %v1154
    %v1156 = vpop.xlane.xlu0 %1155
    %v1157 = vsel %vm359, %v1149, 0.0
    %1158 = vadd.xlane.f32.xlu0 %v1157
    %v1159 = vpop.xlane.xlu0 %1158
    %v1160 = vsel %vm359, %v1151, 0.0
    %1161 = vadd.xlane.f32.xlu0 %v1160
    %v1162 = vpop.xlane.xlu0 %1161
    %v1163 = vsel %vm359, %v1153, 0.0
    %1164 = vadd.xlane.f32.xlu0 %v1163
    %v1165 = vpop.xlane.xlu0 %1164
    %v1166 = vrcp.pop %v1156
    %v1167 = vmul.f32 %v1156, %v1166
    %v1168 = vsub.f32 1.0, %v1167
    %v1169 = vmul.f32 %v1166, %v1168
    %v1170 = vadd.f32 %v1166, %v1169
    %vm1171 = vweird.f32 %v1156
    %vm1172 = vweird.f32 %v1166
    %vm1173 = vmor %vm1171, %vm1172
    %v1174 = vsel %vm1173, %v1166, %v1170
    %v1175 = vand.u32 2147483647, %v1156
    %vm1176 = vcmp.eq.f32.partialorder %v1175, 8.507059e+37
    %v1177 = vand.u32 %v1156, 2147483648
    %v1178 = vor.u32 1.1754944e-38, %v1177
    %v1179 = vsel %vm1176, %v1178, %v1174
    %v1180 = vmul.f32 %v1147, %v1179
    %v1181 = vrcp.pop %v1159
    %v1182 = vmul.f32 %v1159, %v1181
    %v1183 = vsub.f32 1.0, %v1182
    %v1184 = vmul.f32 %v1181, %v1183
    %v1185 = vadd.f32 %v1181, %v1184
    %vm1186 = vweird.f32 %v1159
    %vm1187 = vweird.f32 %v1181
    %vm1188 = vmor %vm1186, %vm1187
    %v1189 = vsel %vm1188, %v1181, %v1185
    %v1190 = vand.u32 2147483647, %v1159
    %vm1191 = vcmp.eq.f32.partialorder %v1190, 8.507059e+37
    %v1192 = vand.u32 %v1159, 2147483648
    %v1193 = vor.u32 1.1754944e-38, %v1192
    %v1194 = vsel %vm1191, %v1193, %v1189
    %v1195 = vmul.f32 %v1149, %v1194
    %v1196 = vrcp.pop %v1162
    %v1197 = vmul.f32 %v1162, %v1196
    %v1198 = vsub.f32 1.0, %v1197
    %v1199 = vmul.f32 %v1196, %v1198
    %v1200 = vadd.f32 %v1196, %v1199
    %vm1201 = vweird.f32 %v1162
    %vm1202 = vweird.f32 %v1196
    %vm1203 = vmor %vm1201, %vm1202
    %v1204 = vsel %vm1203, %v1196, %v1200
    %v1205 = vand.u32 2147483647, %v1162
    %vm1206 = vcmp.eq.f32.partialorder %v1205, 8.507059e+37
    %v1207 = vand.u32 %v1162, 2147483648
    %v1208 = vor.u32 1.1754944e-38, %v1207
    %v1209 = vsel %vm1206, %v1208, %v1204
    %v1210 = vmul.f32 %v1151, %v1209
    %v1211 = vrcp.pop %v1165
    %v1212 = vmul.f32 %v1165, %v1211
    %v1213 = vsub.f32 1.0, %v1212
    %v1214 = vmul.f32 %v1211, %v1213
    %v1215 = vadd.f32 %v1211, %v1214
    %vm1216 = vweird.f32 %v1165
    %vm1217 = vweird.f32 %v1211
    %vm1218 = vmor %vm1216, %vm1217
    %v1219 = vsel %vm1218, %v1211, %v1215
    %v1220 = vand.u32 2147483647, %v1165
    %vm1221 = vcmp.eq.f32.partialorder %v1220, 8.507059e+37
    %v1222 = vand.u32 %v1165, 2147483648
    %v1223 = vor.u32 1.1754944e-38, %v1222
    %v1224 = vsel %vm1221, %v1223, %v1219
    %v1225 = vmul.f32 %v1153, %v1224
    %1226 = vrot.lane.b32.xlu0 %v273, 32
    %v1227 = vpop.permute.xlu0 %1226
    %1228 = vrot.lane.b32.xlu0 %v276, 32
    %v1229 = vpop.permute.xlu0 %1228
    %v1233 = vsel %vm359, %v1180, 0
    %v1236 = vsel %vm359, %v1195, 0
    %1238 = vmatpush.msra.mxu0 0.0
    %1239 = vmatpush.msra.mxu0 0.0
    %1240 = vmatpush.msra.mxu0 0.0
    %1241 = vmatpush.msra.mxu0 0.0
    %1242 = vmatpush.msra.mxu0 0.0
    %1243 = vmatpush.msra.mxu0 0.0
    %1244 = vmatpush.msra.mxu0 0.0
    %1245 = vmatpush.msra.mxu0 0.0
    %1246 = vmatpush.msra.mxu0 0.0
    %1247 = vmatpush.msra.mxu0 0.0
    %1248 = vmatpush.msra.mxu0 0.0
    %1249 = vmatpush.msra.mxu0 0.0
    %1250 = vmatpush.msra.mxu0 0.0
    %1251 = vmatpush.msra.mxu0 0.0
    %1252 = vmatpush.msra.mxu0 %v1229
    %1253 = vmatpush.msra.mxu0 %v1227
    %1254 = vmatmul.f32.gmra.mxu0 %v1233
    %v1255 = vpop.f32.mrf.mxu0
    %v1256 = vadd.f32 0.0, %v1255
    %1257 = vmatmul.f32.gmra.mxu0 %v1236
    %v1258 = vpop.f32.mrf.mxu0
    %v1259 = vadd.f32 0.0, %v1258
    %1260 = vdwg.mxu0
    %1261 = vrot.lane.b32.xlu0 %v279, 32
    %v1262 = vpop.permute.xlu0 %1261
    %1263 = vrot.lane.b32.xlu0 %v282, 32
    %v1264 = vpop.permute.xlu0 %1263
    %v1268 = vsel %vm359, %v1210, 0
    %v1271 = vsel %vm359, %v1225, 0
    %1273 = vmatpush.msra.mxu0 0.0
    %1274 = vmatpush.msra.mxu0 0.0
    %1275 = vmatpush.msra.mxu0 0.0
    %1276 = vmatpush.msra.mxu0 0.0
    %1277 = vmatpush.msra.mxu0 0.0
    %1278 = vmatpush.msra.mxu0 0.0
    %1279 = vmatpush.msra.mxu0 0.0
    %1280 = vmatpush.msra.mxu0 0.0
    %1281 = vmatpush.msra.mxu0 0.0
    %1282 = vmatpush.msra.mxu0 0.0
    %1283 = vmatpush.msra.mxu0 0.0
    %1284 = vmatpush.msra.mxu0 0.0
    %1285 = vmatpush.msra.mxu0 0.0
    %1286 = vmatpush.msra.mxu0 0.0
    %1287 = vmatpush.msra.mxu0 %v1264
    %1288 = vmatpush.msra.mxu0 %v1262
    %1289 = vmatmul.f32.gmra.mxu0 %v1268
    %v1290 = vpop.f32.mrf.mxu0
    %v1291 = vadd.f32 0.0, %v1290
    %1292 = vmatmul.f32.gmra.mxu0 %v1271
    %v1293 = vpop.f32.mrf.mxu0
    %v1294 = vadd.f32 0.0, %v1293
    %1295 = vdwg.mxu0
    %1300 = vrot.lane.b32.xlu0 %v1256, 96
    %v1301 = vpop.permute.xlu0 %1300
    %1302 = vrot.lane.b32.xlu0 %v1259, 96
    %v1303 = vpop.permute.xlu0 %1302
    %1304 = vrot.lane.b32.xlu0 %v1291, 96
    %v1305 = vpop.permute.xlu0 %1304
    %1306 = vrot.lane.b32.xlu0 %v1294, 96
    %v1307 = vpop.permute.xlu0 %1306
    %vm1312 = vcmask 1048320
    %1313 = vst.msk [vmem:[#allocation2] sm:$0xff] %vm1312, %v1301
    %1314 = vst.msk [vmem:[#allocation2 + $0x8] sm:$0xff] %vm1312, %v1303
    %1315 = vst.msk [vmem:[#allocation2 + $0x10] sm:$0xff] %vm1312, %v1305
    %1316 = vst.msk [vmem:[#allocation2 + $0x18] sm:$0xff] %vm1312, %v1307
    %v1317 = vld [vmem:[#allocation2] sm:$0xff]
    %v1318 = vld [vmem:[#allocation2 + $0x8] sm:$0xff]
    %v1319 = vld [vmem:[#allocation2 + $0x10] sm:$0xff]
    %v1320 = vld [vmem:[#allocation2 + $0x18] sm:$0xff]
    %v1321 = vld [vmem:[#allocation9] sm:$0xff]
    %v1322 = vld [vmem:[#allocation9 + $0x8] sm:$0xff]
    %v1323 = vld [vmem:[#allocation9 + $0x10] sm:$0xff]
    %v1324 = vld [vmem:[#allocation9 + $0x18] sm:$0xff]
    %v1325 = vld [vmem:[#allocation9 + $0x20] sm:$0xff]
    %v1326 = vld [vmem:[#allocation9 + $0x28] sm:$0xff]
    %v1327 = vld [vmem:[#allocation9 + $0x30] sm:$0xff]
    %v1328 = vld [vmem:[#allocation9 + $0x38] sm:$0xff]
    %v1329 = vld [vmem:[#allocation9 + $0x40] sm:$0xff]
    %v1330 = vld [vmem:[#allocation9 + $0x48] sm:$0xff]
    %v1331 = vld [vmem:[#allocation9 + $0x50] sm:$0xff]
    %v1332 = vld [vmem:[#allocation9 + $0x58] sm:$0xff]
    %v1333 = vld [vmem:[#allocation9 + $0x60] sm:$0xff]
    %v1334 = vld [vmem:[#allocation9 + $0x68] sm:$0xff]
    %v1335 = vld [vmem:[#allocation9 + $0x70] sm:$0xff]
    %v1336 = vld [vmem:[#allocation9 + $0x78] sm:$0xff]
    %v1337 = vld [vmem:[%s4] sm:$0x1]
    %v1339 = vperm.slane %v1337, 0
    %1341 = vmatpush.msra.mxu0 %v1336
    %1342 = vmatpush.msra.mxu0 %v1335
    %1343 = vmatpush.msra.mxu0 %v1334
    %1344 = vmatpush.msra.mxu0 %v1333
    %1345 = vmatpush.msra.mxu0 %v1332
    %1346 = vmatpush.msra.mxu0 %v1331
    %1347 = vmatpush.msra.mxu0 %v1330
    %1348 = vmatpush.msra.mxu0 %v1329
    %1349 = vmatpush.msra.mxu0 %v1328
    %1350 = vmatpush.msra.mxu0 %v1327
    %1351 = vmatpush.msra.mxu0 %v1326
    %1352 = vmatpush.msra.mxu0 %v1325
    %1353 = vmatpush.msra.mxu0 %v1324
    %1354 = vmatpush.msra.mxu0 %v1323
    %1355 = vmatpush.msra.mxu0 %v1322
    %1356 = vmatpush.msra.mxu0 %v1321
    %1357 = vmatmul.f32.gmra.mxu0 %v1317
    %v1358 = vpop.f32.mrf.mxu0
    %v1359 = vadd.f32 %v1339, %v1358
    %1360 = vmatmul.f32.gmra.mxu0 %v1318
    %v1361 = vpop.f32.mrf.mxu0
    %v1362 = vadd.f32 %v1339, %v1361
    %1363 = vmatmul.f32.gmra.mxu0 %v1319
    %v1364 = vpop.f32.mrf.mxu0
    %v1365 = vadd.f32 %v1339, %v1364
    %1366 = vmatmul.f32.gmra.mxu0 %v1320
    %v1367 = vpop.f32.mrf.mxu0
    %v1368 = vadd.f32 %v1339, %v1367
    %1369 = vdwg.mxu0
    %v1370 = vadd.f32 %v137, %v1359
    %v1371 = vadd.f32 %v138, %v1362
    %v1372 = vadd.f32 %v139, %v1365
    %v1373 = vadd.f32 %v140, %v1368
    %v1374 = vld [vmem:[%s5] sm:$0x1]
    %v1375 = vld [vmem:[%s6] sm:$0x1]
    %1376 = vadd.xlane.f32.xlu0 %v1370
    %v1377 = vpop.xlane.xlu0 %1376
    %1378 = vadd.xlane.f32.xlu0 %v1371
    %v1379 = vpop.xlane.xlu0 %1378
    %1380 = vadd.xlane.f32.xlu0 %v1372
    %v1381 = vpop.xlane.xlu0 %1380
    %1382 = vadd.xlane.f32.xlu0 %v1373
    %v1383 = vpop.xlane.xlu0 %1382
    %v1384 = vrcp.pop 128.0
    %v1385 = vmul.f32 128.0, %v1384
    %v1386 = vsub.f32 1.0, %v1385
    %v1387 = vmul.f32 %v1384, %v1386
    %v1388 = vadd.f32 %v1384, %v1387
    %vm1389 = vweird.f32 %v1384
    %v1390 = vsel %vm1389, %v1384, %v1388
    %v1391 = vmul.f32 %v1377, %v1390
    %v1392 = vmul.f32 %v1379, %v1390
    %v1393 = vmul.f32 %v1381, %v1390
    %v1394 = vmul.f32 %v1383, %v1390
    %v1395 = vmul.f32 %v1370, %v1370
    %v1396 = vmul.f32 %v1371, %v1371
    %v1397 = vmul.f32 %v1372, %v1372
    %v1398 = vmul.f32 %v1373, %v1373
    %1399 = vadd.xlane.f32.xlu0 %v1395
    %v1400 = vpop.xlane.xlu0 %1399
    %1401 = vadd.xlane.f32.xlu0 %v1396
    %v1402 = vpop.xlane.xlu0 %1401
    %1403 = vadd.xlane.f32.xlu0 %v1397
    %v1404 = vpop.xlane.xlu0 %1403
    %1405 = vadd.xlane.f32.xlu0 %v1398
    %v1406 = vpop.xlane.xlu0 %1405
    %v1407 = vmul.f32 %v1400, %v1390
    %v1408 = vmul.f32 %v1402, %v1390
    %v1409 = vmul.f32 %v1404, %v1390
    %v1410 = vmul.f32 %v1406, %v1390
    %v1411 = vmul.f32 %v1391, %v1391
    %v1412 = vmul.f32 %v1392, %v1392
    %v1413 = vmul.f32 %v1393, %v1393
    %v1414 = vmul.f32 %v1394, %v1394
    %v1415 = vsub.f32 %v1407, %v1411
    %v1416 = vsub.f32 %v1408, %v1412
    %v1417 = vsub.f32 %v1409, %v1413
    %v1418 = vsub.f32 %v1410, %v1414
    %v1419 = vmax.f32 %v1415, 0.0
    %v1420 = vmax.f32 %v1416, 0.0
    %v1421 = vmax.f32 %v1417, 0.0
    %v1422 = vmax.f32 %v1418, 0.0
    %v1423 = vsub.f32 %v1370, %v1391
    %v1424 = vsub.f32 %v1371, %v1392
    %v1425 = vsub.f32 %v1372, %v1393
    %v1426 = vsub.f32 %v1373, %v1394
    %v1427 = vadd.f32 %v1419, 1e-05
    %v1428 = vadd.f32 %v1420, 1e-05
    %v1429 = vadd.f32 %v1421, 1e-05
    %v1430 = vadd.f32 %v1422, 1e-05
    %v1431 = vrsqrt.pop %v1427
    %v1432 = vmul.f32 %v1431, %v1427
    %v1433 = vmul.f32 %v1432, %v1431
    %v1434 = vmul.f32 0.5, %v1433
    %v1435 = vsub.f32 1.5, %v1434
    %v1436 = vmul.f32 %v1431, %v1435
    %vm1437 = vweird.f32 %v1427
    %vm1438 = vweird.f32 %v1431
    %vm1439 = vmor %vm1437, %vm1438
    %v1440 = vsel %vm1439, %v1431, %v1436
    %v1441 = vrsqrt.pop %v1428
    %v1442 = vmul.f32 %v1441, %v1428
    %v1443 = vmul.f32 %v1442, %v1441
    %v1444 = vmul.f32 0.5, %v1443
    %v1445 = vsub.f32 1.5, %v1444
    %v1446 = vmul.f32 %v1441, %v1445
    %vm1447 = vweird.f32 %v1428
    %vm1448 = vweird.f32 %v1441
    %vm1449 = vmor %vm1447, %vm1448
    %v1450 = vsel %vm1449, %v1441, %v1446
    %v1451 = vrsqrt.pop %v1429
    %v1452 = vmul.f32 %v1451, %v1429
    %v1453 = vmul.f32 %v1452, %v1451
    %v1454 = vmul.f32 0.5, %v1453
    %v1455 = vsub.f32 1.5, %v1454
    %v1456 = vmul.f32 %v1451, %v1455
    %vm1457 = vweird.f32 %v1429
    %vm1458 = vweird.f32 %v1451
    %vm1459 = vmor %vm1457, %vm1458
    %v1460 = vsel %vm1459, %v1451, %v1456
    %v1461 = vrsqrt.pop %v1430
    %v1462 = vmul.f32 %v1461, %v1430
    %v1463 = vmul.f32 %v1462, %v1461
    %v1464 = vmul.f32 0.5, %v1463
    %v1465 = vsub.f32 1.5, %v1464
    %v1466 = vmul.f32 %v1461, %v1465
    %vm1467 = vweird.f32 %v1430
    %vm1468 = vweird.f32 %v1461
    %vm1469 = vmor %vm1467, %vm1468
    %v1470 = vsel %vm1469, %v1461, %v1466
    %v1471 = vmul.f32 %v1423, %v1440
    %v1472 = vmul.f32 %v1424, %v1450
    %v1473 = vmul.f32 %v1425, %v1460
    %v1474 = vmul.f32 %v1426, %v1470
    %v1476 = vperm.slane %v1374, 0
    %v1478 = vmul.f32 %v1471, %v1476
    %v1479 = vmul.f32 %v1472, %v1476
    %v1480 = vmul.f32 %v1473, %v1476
    %v1481 = vmul.f32 %v1474, %v1476
    %v1483 = vperm.slane %v1375, 0
    %v1485 = vadd.f32 %v1478, %v1483
    %v1486 = vadd.f32 %v1479, %v1483
    %v1487 = vadd.f32 %v1480, %v1483
    %v1488 = vadd.f32 %v1481, %v1483
    %v1489 = vld [vmem:[#allocation11] sm:$0xff]
    %v1490 = vld [vmem:[#allocation11 + $0x8] sm:$0xff]
    %v1491 = vld [vmem:[#allocation11 + $0x10] sm:$0xff]
    %v1492 = vld [vmem:[#allocation11 + $0x18] sm:$0xff]
    %v1493 = vld [vmem:[#allocation11 + $0x20] sm:$0xff]
    %v1494 = vld [vmem:[#allocation11 + $0x28] sm:$0xff]
    %v1495 = vld [vmem:[#allocation11 + $0x30] sm:$0xff]
    %v1496 = vld [vmem:[#allocation11 + $0x38] sm:$0xff]
    %v1497 = vld [vmem:[#allocation11 + $0x40] sm:$0xff]
    %v1498 = vld [vmem:[#allocation11 + $0x48] sm:$0xff]
    %v1499 = vld [vmem:[#allocation11 + $0x50] sm:$0xff]
    %v1500 = vld [vmem:[#allocation11 + $0x58] sm:$0xff]
    %v1501 = vld [vmem:[#allocation11 + $0x60] sm:$0xff]
    %v1502 = vld [vmem:[#allocation11 + $0x68] sm:$0xff]
    %v1503 = vld [vmem:[#allocation11 + $0x70] sm:$0xff]
    %v1504 = vld [vmem:[#allocation11 + $0x78] sm:$0xff]
    %v1505 = vld [vmem:[#allocation11 + $0x80] sm:$0xff]
    %v1506 = vld [vmem:[#allocation11 + $0x88] sm:$0xff]
    %v1507 = vld [vmem:[#allocation11 + $0x90] sm:$0xff]
    %v1508 = vld [vmem:[#allocation11 + $0x98] sm:$0xff]
    %v1509 = vld [vmem:[#allocation11 + $0xa0] sm:$0xff]
    %v1510 = vld [vmem:[#allocation11 + $0xa8] sm:$0xff]
    %v1511 = vld [vmem:[#allocation11 + $0xb0] sm:$0xff]
    %v1512 = vld [vmem:[#allocation11 + $0xb8] sm:$0xff]
    %v1513 = vld [vmem:[#allocation11 + $0xc0] sm:$0xff]
    %v1514 = vld [vmem:[#allocation11 + $0xc8] sm:$0xff]
    %v1515 = vld [vmem:[#allocation11 + $0xd0] sm:$0xff]
    %v1516 = vld [vmem:[#allocation11 + $0xd8] sm:$0xff]
    %v1517 = vld [vmem:[#allocation11 + $0xe0] sm:$0xff]
    %v1518 = vld [vmem:[#allocation11 + $0xe8] sm:$0xff]
    %v1519 = vld [vmem:[#allocation11 + $0xf0] sm:$0xff]
    %v1520 = vld [vmem:[#allocation11 + $0xf8] sm:$0xff]
    %v1521 = vld [vmem:[%s8] sm:$0x3]
    %v1523 = vperm.slane %v1521, 0
    %v1524 = vperm.slane %v1521, 1
    %1527 = vmatpush.msra.mxu0 %v1519
    %1528 = vmatpush.msra.mxu0 %v1517
    %1529 = vmatpush.msra.mxu0 %v1515
    %1530 = vmatpush.msra.mxu0 %v1513
    %1531 = vmatpush.msra.mxu0 %v1511
    %1532 = vmatpush.msra.mxu0 %v1509
    %1533 = vmatpush.msra.mxu0 %v1507
    %1534 = vmatpush.msra.mxu0 %v1505
    %1535 = vmatpush.msra.mxu0 %v1503
    %1536 = vmatpush.msra.mxu0 %v1501
    %1537 = vmatpush.msra.mxu0 %v1499
    %1538 = vmatpush.msra.mxu0 %v1497
    %1539 = vmatpush.msra.mxu0 %v1495
    %1540 = vmatpush.msra.mxu0 %v1493
    %1541 = vmatpush.msra.mxu0 %v1491
    %1542 = vmatpush.msra.mxu0 %v1489
    %1543 = vmatmul.f32.gmra.mxu0 %v1485
    %v1544 = vpop.f32.mrf.mxu0
    %v1545 = vadd.f32 %v1523, %v1544
    %1546 = vmatmul.f32.gmra.mxu0 %v1486
    %v1547 = vpop.f32.mrf.mxu0
    %v1548 = vadd.f32 %v1523, %v1547
    %1549 = vmatmul.f32.gmra.mxu0 %v1487
    %v1550 = vpop.f32.mrf.mxu0
    %v1551 = vadd.f32 %v1523, %v1550
    %1552 = vmatmul.f32.gmra.mxu0 %v1488
    %v1553 = vpop.f32.mrf.mxu0
    %v1554 = vadd.f32 %v1523, %v1553
    %1555 = vdwg.mxu0
    %1556 = vmatpush.msra.mxu0 %v1520
    %1557 = vmatpush.msra.mxu0 %v1518
    %1558 = vmatpush.msra.mxu0 %v1516
    %1559 = vmatpush.msra.mxu0 %v1514
    %1560 = vmatpush.msra.mxu0 %v1512
    %1561 = vmatpush.msra.mxu0 %v1510
    %1562 = vmatpush.msra.mxu0 %v1508
    %1563 = vmatpush.msra.mxu0 %v1506
    %1564 = vmatpush.msra.mxu0 %v1504
    %1565 = vmatpush.msra.mxu0 %v1502
    %1566 = vmatpush.msra.mxu0 %v1500
    %1567 = vmatpush.msra.mxu0 %v1498
    %1568 = vmatpush.msra.mxu0 %v1496
    %1569 = vmatpush.msra.mxu0 %v1494
    %1570 = vmatpush.msra.mxu0 %v1492
    %1571 = vmatpush.msra.mxu0 %v1490
    %1572 = vmatmul.f32.gmra.mxu0 %v1485
    %v1573 = vpop.f32.mrf.mxu0
    %v1574 = vadd.f32 %v1524, %v1573
    %1575 = vmatmul.f32.gmra.mxu0 %v1486
    %v1576 = vpop.f32.mrf.mxu0
    %v1577 = vadd.f32 %v1524, %v1576
    %1578 = vmatmul.f32.gmra.mxu0 %v1487
    %v1579 = vpop.f32.mrf.mxu0
    %v1580 = vadd.f32 %v1524, %v1579
    %1581 = vmatmul.f32.gmra.mxu0 %v1488
    %v1582 = vpop.f32.mrf.mxu0
    %v1583 = vadd.f32 %v1524, %v1582
    %1584 = vdwg.mxu0
    %v1585 = vmax.f32 %v1545, 0.0
    %v1586 = vmax.f32 %v1574, 0.0
    %v1587 = vmax.f32 %v1548, 0.0
    %v1588 = vmax.f32 %v1577, 0.0
    %v1589 = vmax.f32 %v1551, 0.0
    %v1590 = vmax.f32 %v1580, 0.0
    %v1591 = vmax.f32 %v1554, 0.0
    %v1592 = vmax.f32 %v1583, 0.0
    %v1593 = vld [vmem:[#allocation12] sm:$0xff]
    %v1594 = vld [vmem:[#allocation12 + $0x8] sm:$0xff]
    %v1595 = vld [vmem:[#allocation12 + $0x10] sm:$0xff]
    %v1596 = vld [vmem:[#allocation12 + $0x18] sm:$0xff]
    %v1597 = vld [vmem:[#allocation12 + $0x20] sm:$0xff]
    %v1598 = vld [vmem:[#allocation12 + $0x28] sm:$0xff]
    %v1599 = vld [vmem:[#allocation12 + $0x30] sm:$0xff]
    %v1600 = vld [vmem:[#allocation12 + $0x38] sm:$0xff]
    %v1601 = vld [vmem:[#allocation12 + $0x40] sm:$0xff]
    %v1602 = vld [vmem:[#allocation12 + $0x48] sm:$0xff]
    %v1603 = vld [vmem:[#allocation12 + $0x50] sm:$0xff]
    %v1604 = vld [vmem:[#allocation12 + $0x58] sm:$0xff]
    %v1605 = vld [vmem:[#allocation12 + $0x60] sm:$0xff]
    %v1606 = vld [vmem:[#allocation12 + $0x68] sm:$0xff]
    %v1607 = vld [vmem:[#allocation12 + $0x70] sm:$0xff]
    %v1608 = vld [vmem:[#allocation12 + $0x78] sm:$0xff]
    %v1609 = vld [vmem:[#allocation12 + $0x80] sm:$0xff]
    %v1610 = vld [vmem:[#allocation12 + $0x88] sm:$0xff]
    %v1611 = vld [vmem:[#allocation12 + $0x90] sm:$0xff]
    %v1612 = vld [vmem:[#allocation12 + $0x98] sm:$0xff]
    %v1613 = vld [vmem:[#allocation12 + $0xa0] sm:$0xff]
    %v1614 = vld [vmem:[#allocation12 + $0xa8] sm:$0xff]
    %v1615 = vld [vmem:[#allocation12 + $0xb0] sm:$0xff]
    %v1616 = vld [vmem:[#allocation12 + $0xb8] sm:$0xff]
    %v1617 = vld [vmem:[#allocation12 + $0xc0] sm:$0xff]
    %v1618 = vld [vmem:[#allocation12 + $0xc8] sm:$0xff]
    %v1619 = vld [vmem:[#allocation12 + $0xd0] sm:$0xff]
    %v1620 = vld [vmem:[#allocation12 + $0xd8] sm:$0xff]
    %v1621 = vld [vmem:[#allocation12 + $0xe0] sm:$0xff]
    %v1622 = vld [vmem:[#allocation12 + $0xe8] sm:$0xff]
    %v1623 = vld [vmem:[#allocation12 + $0xf0] sm:$0xff]
    %v1624 = vld [vmem:[#allocation12 + $0xf8] sm:$0xff]
    %v1625 = vld [vmem:[%s10] sm:$0x1]
    %v1627 = vperm.slane %v1625, 0
    %1629 = vmatpush.msra.mxu0 %v1608
    %1630 = vmatpush.msra.mxu0 %v1607
    %1631 = vmatpush.msra.mxu0 %v1606
    %1632 = vmatpush.msra.mxu0 %v1605
    %1633 = vmatpush.msra.mxu0 %v1604
    %1634 = vmatpush.msra.mxu0 %v1603
    %1635 = vmatpush.msra.mxu0 %v1602
    %1636 = vmatpush.msra.mxu0 %v1601
    %1637 = vmatpush.msra.mxu0 %v1600
    %1638 = vmatpush.msra.mxu0 %v1599
    %1639 = vmatpush.msra.mxu0 %v1598
    %1640 = vmatpush.msra.mxu0 %v1597
    %1641 = vmatpush.msra.mxu0 %v1596
    %1642 = vmatpush.msra.mxu0 %v1595
    %1643 = vmatpush.msra.mxu0 %v1594
    %1644 = vmatpush.msra.mxu0 %v1593
    %1645 = vmatmul.f32.gmra.mxu0 %v1585
    %v1646 = vpop.f32.mrf.mxu0
    %v1647 = vadd.f32 %v1627, %v1646
    %1648 = vmatmul.f32.gmra.mxu0 %v1587
    %v1649 = vpop.f32.mrf.mxu0
    %v1650 = vadd.f32 %v1627, %v1649
    %1651 = vmatmul.f32.gmra.mxu0 %v1589
    %v1652 = vpop.f32.mrf.mxu0
    %v1653 = vadd.f32 %v1627, %v1652
    %1654 = vmatmul.f32.gmra.mxu0 %v1591
    %v1655 = vpop.f32.mrf.mxu0
    %v1656 = vadd.f32 %v1627, %v1655
    %1657 = vdwg.mxu0
    %1658 = vmatpush.msra.mxu0 %v1624
    %1659 = vmatpush.msra.mxu0 %v1623
    %1660 = vmatpush.msra.mxu0 %v1622
    %1661 = vmatpush.msra.mxu0 %v1621
    %1662 = vmatpush.msra.mxu0 %v1620
    %1663 = vmatpush.msra.mxu0 %v1619
    %1664 = vmatpush.msra.mxu0 %v1618
    %1665 = vmatpush.msra.mxu0 %v1617
    %1666 = vmatpush.msra.mxu0 %v1616
    %1667 = vmatpush.msra.mxu0 %v1615
    %1668 = vmatpush.msra.mxu0 %v1614
    %1669 = vmatpush.msra.mxu0 %v1613
    %1670 = vmatpush.msra.mxu0 %v1612
    %1671 = vmatpush.msra.mxu0 %v1611
    %1672 = vmatpush.msra.mxu0 %v1610
    %1673 = vmatpush.msra.mxu0 %v1609
    %1674 = vmatmul.f32.gmra.mxu0 %v1586
    %v1675 = vpop.f32.mrf.mxu0
    %v1676 = vadd.f32 %v1647, %v1675
    %1677 = vmatmul.f32.gmra.mxu0 %v1588
    %v1678 = vpop.f32.mrf.mxu0
    %v1679 = vadd.f32 %v1650, %v1678
    %1680 = vmatmul.f32.gmra.mxu0 %v1590
    %v1681 = vpop.f32.mrf.mxu0
    %v1682 = vadd.f32 %v1653, %v1681
    %1683 = vmatmul.f32.gmra.mxu0 %v1592
    %v1684 = vpop.f32.mrf.mxu0
    %v1685 = vadd.f32 %v1656, %v1684
    %1686 = vdwg.mxu0
    %v1687 = vadd.f32 %v1485, %v1676
    %v1688 = vadd.f32 %v1486, %v1679
    %v1689 = vadd.f32 %v1487, %v1682
    %v1690 = vadd.f32 %v1488, %v1685
    %v1691 = vld [vmem:[%s11] sm:$0x1]
    %v1692 = vld [vmem:[%s12] sm:$0x1]
    %1693 = vadd.xlane.f32.xlu0 %v1687
    %v1694 = vpop.xlane.xlu0 %1693
    %1695 = vadd.xlane.f32.xlu0 %v1688
    %v1696 = vpop.xlane.xlu0 %1695
    %1697 = vadd.xlane.f32.xlu0 %v1689
    %v1698 = vpop.xlane.xlu0 %1697
    %1699 = vadd.xlane.f32.xlu0 %v1690
    %v1700 = vpop.xlane.xlu0 %1699
    %v1701 = vmul.f32 %v1694, %v1390
    %v1702 = vmul.f32 %v1696, %v1390
    %v1703 = vmul.f32 %v1698, %v1390
    %v1704 = vmul.f32 %v1700, %v1390
    %v1705 = vmul.f32 %v1687, %v1687
    %v1706 = vmul.f32 %v1688, %v1688
    %v1707 = vmul.f32 %v1689, %v1689
    %v1708 = vmul.f32 %v1690, %v1690
    %1709 = vadd.xlane.f32.xlu0 %v1705
    %v1710 = vpop.xlane.xlu0 %1709
    %1711 = vadd.xlane.f32.xlu0 %v1706
    %v1712 = vpop.xlane.xlu0 %1711
    %1713 = vadd.xlane.f32.xlu0 %v1707
    %v1714 = vpop.xlane.xlu0 %1713
    %1715 = vadd.xlane.f32.xlu0 %v1708
    %v1716 = vpop.xlane.xlu0 %1715
    %v1717 = vmul.f32 %v1710, %v1390
    %v1718 = vmul.f32 %v1712, %v1390
    %v1719 = vmul.f32 %v1714, %v1390
    %v1720 = vmul.f32 %v1716, %v1390
    %v1721 = vmul.f32 %v1701, %v1701
    %v1722 = vmul.f32 %v1702, %v1702
    %v1723 = vmul.f32 %v1703, %v1703
    %v1724 = vmul.f32 %v1704, %v1704
    %v1725 = vsub.f32 %v1717, %v1721
    %v1726 = vsub.f32 %v1718, %v1722
    %v1727 = vsub.f32 %v1719, %v1723
    %v1728 = vsub.f32 %v1720, %v1724
    %v1729 = vmax.f32 %v1725, 0.0
    %v1730 = vmax.f32 %v1726, 0.0
    %v1731 = vmax.f32 %v1727, 0.0
    %v1732 = vmax.f32 %v1728, 0.0
    %v1733 = vsub.f32 %v1687, %v1701
    %v1734 = vsub.f32 %v1688, %v1702
    %v1735 = vsub.f32 %v1689, %v1703
    %v1736 = vsub.f32 %v1690, %v1704
    %v1737 = vadd.f32 %v1729, 1e-05
    %v1738 = vadd.f32 %v1730, 1e-05
    %v1739 = vadd.f32 %v1731, 1e-05
    %v1740 = vadd.f32 %v1732, 1e-05
    %v1741 = vrsqrt.pop %v1737
    %v1742 = vmul.f32 %v1741, %v1737
    %v1743 = vmul.f32 %v1742, %v1741
    %v1744 = vmul.f32 0.5, %v1743
    %v1745 = vsub.f32 1.5, %v1744
    %v1746 = vmul.f32 %v1741, %v1745
    %vm1747 = vweird.f32 %v1737
    %vm1748 = vweird.f32 %v1741
    %vm1749 = vmor %vm1747, %vm1748
    %v1750 = vsel %vm1749, %v1741, %v1746
    %v1751 = vrsqrt.pop %v1738
    %v1752 = vmul.f32 %v1751, %v1738
    %v1753 = vmul.f32 %v1752, %v1751
    %v1754 = vmul.f32 0.5, %v1753
    %v1755 = vsub.f32 1.5, %v1754
    %v1756 = vmul.f32 %v1751, %v1755
    %vm1757 = vweird.f32 %v1738
    %vm1758 = vweird.f32 %v1751
    %vm1759 = vmor %vm1757, %vm1758
    %v1760 = vsel %vm1759, %v1751, %v1756
    %v1761 = vrsqrt.pop %v1739
    %v1762 = vmul.f32 %v1761, %v1739
    %v1763 = vmul.f32 %v1762, %v1761
    %v1764 = vmul.f32 0.5, %v1763
    %v1765 = vsub.f32 1.5, %v1764
    %v1766 = vmul.f32 %v1761, %v1765
    %vm1767 = vweird.f32 %v1739
    %vm1768 = vweird.f32 %v1761
    %vm1769 = vmor %vm1767, %vm1768
    %v1770 = vsel %vm1769, %v1761, %v1766
    %v1771 = vrsqrt.pop %v1740
    %v1772 = vmul.f32 %v1771, %v1740
    %v1773 = vmul.f32 %v1772, %v1771
    %v1774 = vmul.f32 0.5, %v1773
    %v1775 = vsub.f32 1.5, %v1774
    %v1776 = vmul.f32 %v1771, %v1775
    %vm1777 = vweird.f32 %v1740
    %vm1778 = vweird.f32 %v1771
    %vm1779 = vmor %vm1777, %vm1778
    %v1780 = vsel %vm1779, %v1771, %v1776
    %v1781 = vmul.f32 %v1733, %v1750
    %v1782 = vmul.f32 %v1734, %v1760
    %v1783 = vmul.f32 %v1735, %v1770
    %v1784 = vmul.f32 %v1736, %v1780
    %v1786 = vperm.slane %v1691, 0
    %v1788 = vmul.f32 %v1781, %v1786
    %v1789 = vmul.f32 %v1782, %v1786
    %v1790 = vmul.f32 %v1783, %v1786
    %v1791 = vmul.f32 %v1784, %v1786
    %v1793 = vperm.slane %v1692, 0
    %v1795 = vadd.f32 %v1788, %v1793
    %v1796 = vadd.f32 %v1789, %v1793
    %v1797 = vadd.f32 %v1790, %v1793
    %v1798 = vadd.f32 %v1791, %v1793
    %1799 = vst [vmem:[#allocation14] sm:$0xff] %v1795
    %1800 = vst [vmem:[#allocation14 + $0x8] sm:$0xff] %v1796
    %1801 = vst [vmem:[#allocation14 + $0x10] sm:$0xff] %v1797
    %1802 = vst [vmem:[#allocation14 + $0x18] sm:$0xff] %v1798
    // Predicated region
    $region78: #{tpu_custom_call.1} parent=1 // pred_check
      _
    $region79: #{tpu_custom_call.1} parent=1 // pred_check_branch
      %1804 = sbr.rel (0) target = $region81
    $region80: #{tpu_custom_call.1} parent=1 // pred_region
      %1806 = vsyncadd [#allocation5], 0
      %s1807 = sshll.u32 [#allocation14], 4
      %s1808 = int_to_ptr.vmem [resolvable:$true] %s1807
      %s1809 = sshll.u32 %s13, 4
      %s1810 = int_to_ptr.hbm [resolvable:$true] %s1809
      %1815 = dma.vmem_to_hbm [thread:$0]  %s1808, 512, %s1810, [#allocation5], 128, 128, 8
    $region81: #{tpu_custom_call.1} parent=1 // pred_fallthru
      _
    // Predicated region
    $region82: #{tpu_custom_call.1} parent=1 // pred_check
      _
    $region83: #{tpu_custom_call.1} parent=1 // pred_check_branch
      %1817 = sbr.rel (0) target = $region85
    $region84: #{tpu_custom_call.1} parent=1 // pred_region
      %1819 = dma.done [#allocation5], 512
    $region85: #{tpu_custom_call.1} parent=1 // pred_fallthru
      _
    %1820 = vsyncpa [#allocation4], 1
    %1821 = vsyncpa [#allocation7], 1
    %1822 = vsyncpa [#allocation10], 1
    %1823 = vsyncpa [#allocation13], 1
    %1824 = vsyncpa [#allocation5], 1

</llo_original>
